<compile_context>
chip_gen: v7x
topology: tpu7x:2x2x1
jax: 0.10.0
libtpu: 0.0.40
codegen_flags: <defaults>
</compile_context>

<pallas_src>
import math

import jax
import jax.numpy as jnp
from jax.experimental import pallas as pl
from jax.experimental.pallas import tpu as pltpu


# Row indices of the packed (8, D) per-feature vector bundle (one sublane tile, one DMA).
_VG1, _VB1, _VBV, _VBO, _VG2, _VB2, _VBL2 = range(7)


def _layer_norm(x, gamma, beta, eps=1e-5, two_pass=False):
    mu = jnp.mean(x, axis=-1, keepdims=True)
    if two_pass:
        # Two-pass variance: robust against cancellation when the residual has large mean.
        xc = x - mu
        var = jnp.mean(xc * xc, axis=-1, keepdims=True)
        return xc * jax.lax.rsqrt(var + eps) * gamma + beta
    # One-pass statistics (var = E[x^2] - mu^2) — fine for the first, well-scaled norm.
    ms = jnp.mean(x * x, axis=-1, keepdims=True)
    var = ms - mu * mu
    return (x - mu) * jax.lax.rsqrt(var + eps) * gamma + beta


def _encoder_layer_kernel(
    src_ref, pos_ref, vec_ref,
    wqk_ref, bqk_ref, wv_ref, wo_ref,
    w1_ref, bl1_ref, w2_ref,
    out_ref, attn_ref, ctx_scr, attn_scr,     # attn_ref / attn_scr are None when not requested
    *, nhead, f_chunk,
):
    # One grid step processes `bt` batch elements; all dense projections and the FFN run on
    # the flattened (bt*S, D) activation so the MXU gets a large M per pass.
    x3 = src_ref[...].astype(jnp.float32)      # (bt, S, D)
    p3 = pos_ref[...].astype(jnp.float32)
    bt, S, D = x3.shape
    hd = D // nhead
    M = bt * S
    F = w1_ref.shape[1]
    need_attn = attn_ref is not None

    vecs = vec_ref[...]                        # (8, D) f32 — packed gammas/betas/biases
    g1, b1 = vecs[_VG1:_VG1 + 1], vecs[_VB1:_VB1 + 1]
    b_v, b_o = vecs[_VBV:_VBV + 1], vecs[_VBO:_VBO + 1]
    g2, b2 = vecs[_VG2:_VG2 + 1], vecs[_VB2:_VB2 + 1]
    bl2 = vecs[_VBL2:_VBL2 + 1]

    x = x3.reshape(M, D)
    p = p3.reshape(M, D)

    # ---- pre-norm + positional embedding -----------------------------------
    xn = _layer_norm(x, g1, b1)
    qk_in = (xn + p).astype(jnp.bfloat16)
    xn_b = xn.astype(jnp.bfloat16)

    # ---- fused Q/K projection (one (M,D)x(D,2D) matmul) + V projection ------
    # Weights pre-transposed in the wrapper; 1/sqrt(hd) folded into Wq/bq.
    qk = jnp.dot(qk_in, wqk_ref[...], preferred_element_type=jnp.float32) + bqk_ref[...]
    v = jnp.dot(xn_b, wv_ref[...], preferred_element_type=jnp.float32) + b_v

    qk3 = qk.reshape(bt, S, 2 * D).astype(jnp.bfloat16)
    v3 = v.reshape(bt, S, D).astype(jnp.bfloat16)

    # ---- per-head scaled dot-product attention, batched over bt --------------
    # Each head's context is streamed straight into its lane slice of ctx_scr (no lane-dim
    # concatenate, live set = one head); attention weights accumulate in f32 scratch.
    # TODO(synk): a fully head-batched formulation ('bqhd,bkhd->bhqk') needs a rank-4
    # multi-batch dot_general / second-minor transpose that Mosaic does not reliably lower;
    # heads stay statically unrolled.
    # TODO(synk): flash-style KV tiling (second "arbitrary" grid axis + online softmax) for
    # large S, so the (bt,S,S) f32 scores never materialize — needed on v7x at big S.
    for h in range(nhead):
        qh = qk3[:, :, h * hd:(h + 1) * hd]
        kh = qk3[:, :, D + h * hd:D + (h + 1) * hd]
        vh = v3[:, :, h * hd:(h + 1) * hd]
        s = jnp.einsum("bqd,bkd->bqk", qh, kh, preferred_element_type=jnp.float32)
        s = s - jnp.max(s, axis=-1, keepdims=True)
        e = jnp.exp(s)
        denom = jnp.sum(e, axis=-1, keepdims=True)
        # Exact reciprocal when attention weights are returned (rows sum to 1); approx (EUP)
        # otherwise — the context matmul tolerates it.
        w = e * pl.reciprocal(denom, approx=not need_attn)
        if need_attn:
            if h == 0:
                attn_scr[...] = w
            else:
                attn_scr[...] += w
        o_h = jnp.einsum("bqk,bkd->bqd", w.astype(jnp.bfloat16), vh,
                         preferred_element_type=jnp.float32)
        ctx_scr[:, h * hd:(h + 1) * hd] = o_h.reshape(M, hd).astype(jnp.bfloat16)

    attn_out = jnp.dot(ctx_scr[...], wo_ref[...], preferred_element_type=jnp.float32) + b_o

    # ---- residual 1 + pre-norm FFN (chunked over the hidden dim) -------------
    y = x + attn_out
    yn = _layer_norm(y, g2, b2, two_pass=True).astype(jnp.bfloat16)

    bl1 = bl1_ref[...]                         # (1, F)
    ff = None
    for fc in range(0, F, f_chunk):
        c = min(f_chunk, F - fc)
        h1 = jnp.maximum(
            jnp.dot(yn, w1_ref[:, fc:fc + c], preferred_element_type=jnp.float32)
            + bl1[:, fc:fc + c], 0.0)
        contrib = jnp.dot(h1.astype(jnp.bfloat16), w2_ref[fc:fc + c, :],
                          preferred_element_type=jnp.float32)
        ff = contrib if ff is None else ff + contrib

    out_ref[...] = (y + ff + bl2).reshape(bt, S, D).astype(out_ref.dtype)
    if need_attn:
        # TODO(synk): for S not a multiple of 128 this store is masked (vst.msk); pad S for a
        # lane-dense out_spec when attention weights are needed at production scale.
        attn_ref[...] = (attn_scr[...] * (1.0 / nhead)).astype(attn_ref.dtype)


def _vmem_budget():
    """(physical VMEM per core, vmem_limit_bytes to request) — generation aware."""
    cap = 64 * 1024 * 1024                     # conservative default (fits every generation)
    try:
        info = pltpu.get_tpu_info()
        cap = int(getattr(info, "vmem_capacity_bytes", cap) or cap)
    except Exception:
        pass
    # ~52 MiB on v7x (64 MiB/TC), ~104 MiB on v5e/v6e (128 MiB): headroom for compiler scratch.
    return cap, (cap * 13) // 16


def _const_spec(shape):
    """BlockSpec for a grid-invariant (weight) input: single-buffered, block index 0."""
    index_map = lambda i: tuple(0 for _ in shape)
    try:
        return pl.BlockSpec(shape, index_map, pipeline_mode=pl.Buffered(1))
    except (TypeError, AttributeError):
        return pl.BlockSpec(shape, index_map)  # older Pallas: fall back to default buffering


def _pick_batch_tile(B, S, D, F, f_chunk, need_attn, act_budget_bytes, max_rows):
    """Largest divisor of B whose per-step VMEM estimate fits, capped so grid >= 2 steps."""
    cap_bt = B if B == 1 else max(1, B // 2)   # >=2 "parallel" steps -> v7x 2nd TC gets work
    best = 1
    for d in range(1, cap_bt + 1):
        if B % d:
            continue
        M = d * S
        if M > max_rows:
            continue
        est = (
            6 * M * D * 4                                  # double-buffered src/pos/out tiles
            + 8 * M * D * 4                                # live f32 activations (x,p,xn,qk,v,y,yn)
            + 3 * M * f_chunk * 4                          # FFN chunk intermediates
            + (5 if need_attn else 3) * d * S * S * 4      # scores/exp (+ attn accum & out bufs)
            + 3 * M * D * 2                                # bf16 copies + ctx scratch
        )
        if est <= act_budget_bytes:
            best = d
    return best


def transformer_encoder_layer(src, pos, params, *, nhead, need_attn_weights=True,
                              attn_weights_dtype=jnp.bfloat16):
    """src, pos: (S, B, D).  Returns (out (S,B,D), attn (B,S,S)) or just out.

    Attention weights are head-averaged (like nn.MultiheadAttention) and stored in
    `attn_weights_dtype` (bf16 default to halve the dominant HBM writeback; pass
    jnp.float32 for bit-closer parity with PyTorch).
    """
    S, B, D = src.shape
    F = params["w1"].shape[0]
    assert D % nhead == 0
    hd = D // nhead
    scale = 1.0 / math.sqrt(hd)
    cdt = jnp.bfloat16     # MXU-native compute dtype; accumulation stays f32.

    # ---- wrapper-side (XLA) weight prep: pre-transpose so the kernel does x @ W, fuse Q&K
    #      into one (D,2D) weight, fold 1/sqrt(hd) into Wq/bq, cast matmul weights to bf16.
    wqkv = params["wqkv"].astype(jnp.float32)                 # (3D, D), PyTorch layout
    bqkv = params["bqkv"].astype(jnp.float32).reshape(3 * D)
    w_qk = jnp.concatenate([wqkv[:D].T * scale, wqkv[D:2 * D].T], axis=1).astype(cdt)  # (D,2D)
    b_qk = jnp.concatenate([bqkv[:D] * scale, bqkv[D:2 * D]]).reshape(1, 2 * D)
    w_v = wqkv[2 * D:].T.astype(cdt)                          # (D, D)
    wo_t = params["wo"].astype(jnp.float32).T.astype(cdt)     # (D, D)
    w1_t = params["w1"].astype(jnp.float32).T.astype(cdt)     # (D, F)
    bl1 = params["bl1"].astype(jnp.float32).reshape(1, F)
    w2_t = params["w2"].astype(jnp.float32).T.astype(cdt)     # (F, D)

    # Pack all (D,)-length vectors into one (8, D) f32 array: one sublane tile, one DMA,
    # instead of seven tiny (1,D) inputs each padded to a full sublane tile.
    vec_pack = jnp.zeros((8, D), jnp.float32).at[:7].set(jnp.stack([
        params["g1"].astype(jnp.float32).reshape(D),
        params["b1"].astype(jnp.float32).reshape(D),
        bqkv[2 * D:],                                   # V bias
        params["bo"].astype(jnp.float32).reshape(D),
        params["g2"].astype(jnp.float32).reshape(D),
        params["b2"].astype(jnp.float32).reshape(D),
        params["bl2"].astype(jnp.float32).reshape(D),
    ]))

    # TODO(synk): block the native (S,B,D) layout directly (BlockSpec((S,bt,D)) + one in-VMEM
    # rearrangement per tile) to drop these three full-tensor HBM transpose round trips.
    src_b = jnp.transpose(src, (1, 0, 2))   # (B, S, D)
    pos_b = jnp.transpose(pos, (1, 0, 2))

    # ---- generation-aware VMEM budgeting (v5e/v6e: 128 MiB/TC, v7x: 64 MiB/TC) ------------
    vmem_cap, vmem_limit = _vmem_budget()
    f_chunk = min(F, 1024)                                   # bounds the (M,F) f32 intermediate
    weight_bytes = (2 * D * D + D * D + D * D + 2 * D * F) * 2 + (2 * D + F + 8 * D) * 4
    act_budget = max(vmem_limit - weight_bytes - (6 << 20), 2 << 20)
    max_rows = 2048 if vmem_cap >= (96 << 20) else 1024
    bt = _pick_batch_tile(B, S, D, F, f_chunk, need_attn_weights, act_budget, max_rows)
    grid = (B // bt,)

    row_spec = pl.BlockSpec((bt, S, D), lambda i: (i, 0, 0))
    in_specs = [
        row_spec, row_spec,                                  # src, pos
        _const_spec((8, D)),                                 # packed gammas/betas/biases
        _const_spec((D, 2 * D)), _const_spec((1, 2 * D)),    # fused QK projection
        _const_spec((D, D)),                                 # V projection
        _const_spec((D, D)),                                 # out projection
        _const_spec((D, F)), _const_spec((1, F)),            # linear1
        _const_spec((F, D)),                                 # linear2
    ]
    scratch_shapes = [pltpu.VMEM((bt * S, D), jnp.bfloat16)]           # per-head context

    if need_attn_weights:
        scratch_shapes.append(pltpu.VMEM((bt, S, S), jnp.float32))     # head-sum of weights

        def kernel(*refs):
            *ins, out_r, attn_r, ctx_s, attn_s = refs
            _encoder_layer_kernel(*ins, out_r, attn_r, ctx_s, attn_s,
                                  nhead=nhead, f_chunk=f_chunk)

        out_shape = (jax.ShapeDtypeStruct((B, S, D), src.dtype),
                     jax.ShapeDtypeStruct((B, S, S), attn_weights_dtype))
        out_specs = (pl.BlockSpec((bt, S, D), lambda i: (i, 0, 0)),
                     pl.BlockSpec((bt, S, S), lambda i: (i, 0, 0)))
    else:
        def kernel(*refs):
            *ins, out_r, ctx_s = refs
            _encoder_layer_kernel(*ins, out_r, None, ctx_s, None,
                                  nhead=nhead, f_chunk=f_chunk)

        out_shape = jax.ShapeDtypeStruct((B, S, D), src.dtype)
        out_specs = pl.BlockSpec((bt, S, D), lambda i: (i, 0, 0))

    result = pl.pallas_call(
        kernel,
        out_shape=out_shape,
        grid_spec=pltpu.PrefetchScalarGridSpec(
            num_scalar_prefetch=0,
            grid=grid,
            in_specs=in_specs,
            out_specs=out_specs,
            scratch_shapes=scratch_shapes,
        ),
        compiler_params=pltpu.CompilerParams(
            dimension_semantics=("parallel",),
            vmem_limit_bytes=int(vmem_limit),
        ),
    )(
        src_b, pos_b, vec_pack,
        w_qk, b_qk, w_v, wo_t,
        w1_t, bl1, w2_t,
    )

    if need_attn_weights:
        out_b, attn = result
        return jnp.transpose(out_b, (1, 0, 2)), attn
    return jnp.transpose(result, (1, 0, 2))


# --------------------------------------------------------------------------
# Pure-JAX reference (mirrors the PyTorch module in eval mode) for checking.
# --------------------------------------------------------------------------
def reference(src, pos, params, *, nhead):
    S, B, D = src.shape
    hd = D // nhead

    def ln(x, g, b):
        mu = jnp.mean(x, axis=-1, keepdims=True)
        var = jnp.mean((x - mu) ** 2, axis=-1, keepdims=True)
        return (x - mu) / jnp.sqrt(var + 1e-5) * g + b

    x = jnp.transpose(src, (1, 0, 2))   # (B, S, D)
    p = jnp.transpose(pos, (1, 0, 2))
    xn = ln(x, params["g1"], params["b1"])
    qk = xn + p
    wqkv, bqkv = params["wqkv"], params["bqkv"]
    q = qk @ wqkv[:D].T + bqkv[:D]
    k = qk @ wqkv[D:2 * D].T + bqkv[D:2 * D]
    v = xn @ wqkv[2 * D:].T + bqkv[2 * D:]
    q = q / math.sqrt(hd)

    def split(t):  # (B, S, D) -> (B, H, S, hd)
        return t.reshape(B, S, nhead, hd).transpose(0, 2, 1, 3)

    qh, kh, vh = split(q), split(k), split(v)
    s = jnp.einsum("bhqd,bhkd->bhqk", qh, kh)
    w = jax.nn.softmax(s, axis=-1)
    o = jnp.einsum("bhqk,bhkd->bhqd", w, vh).transpose(0, 2, 1, 3).reshape(B, S, D)
    o = o @ params["wo"].T + params["bo"]
    y = x + o
    yn = ln(y, params["g2"], params["b2"])
    h1 = jax.nn.relu(yn @ params["w1"].T + params["bl1"])
    ff = h1 @ params["w2"].T + params["bl2"]
    out = y + ff
    return jnp.transpose(out, (1, 0, 2)), jnp.mean(w, axis=1)


if __name__ == "__main__":
    S, B, D, H, FF = 8, 2, 32, 4, 64

    key = jax.random.PRNGKey(0)
    keys = jax.random.split(key, 12)

    params = {
        "g1": jnp.ones((D,), jnp.float32),
        "b1": jnp.zeros((D,), jnp.float32),
        "wqkv": 0.05 * jax.random.normal(keys[0], (3 * D, D), jnp.float32),
        "bqkv": 0.01 * jax.random.normal(keys[1], (3 * D,), jnp.float32),
        "wo": 0.05 * jax.random.normal(keys[2], (D, D), jnp.float32),
        "bo": 0.01 * jax.random.normal(keys[3], (D,), jnp.float32),
        "g2": jnp.ones((D,), jnp.float32),
        "b2": jnp.zeros((D,), jnp.float32),
        "w1": 0.05 * jax.random.normal(keys[4], (FF, D), jnp.float32),
        "bl1": 0.01 * jax.random.normal(keys[5], (FF,), jnp.float32),
        "w2": 0.05 * jax.random.normal(keys[6], (D, FF), jnp.float32),
        "bl2": 0.01 * jax.random.normal(keys[7], (D,), jnp.float32),
    }

    src = jax.random.normal(keys[8], (S, B, D), jnp.float32)
    pos = jax.random.normal(keys[9], (S, B, D), jnp.float32)

    out, attnw = transformer_encoder_layer(src, pos, params, nhead=H)
    out = jax.block_until_ready(out)
    attnw = jax.block_until_ready(attnw)

    ref_out, ref_attn = reference(src, pos, params, nhead=H)
    assert out.shape == (S, B, D) and attnw.shape == (B, S, S)
    # bf16 MXU inputs (and bf16 attn-weight storage) -> loosened tolerances.
    assert jnp.allclose(out, ref_out, atol=2e-2, rtol=2e-2)
    assert jnp.allclose(attnw.astype(jnp.float32), ref_attn, atol=2e-2, rtol=2e-2)

    # Optional path: skip the (B,S,S) attention-weights writeback entirely.
    out2 = transformer_encoder_layer(src, pos, params, nhead=H, need_attn_weights=False)
    out2 = jax.block_until_ready(out2)
    assert jnp.allclose(out2, ref_out, atol=2e-2, rtol=2e-2)

    print("KERNEL_OK")
</pallas_src>

<mosaic_0001>
module attributes {stable_mosaic.version = 11 : i64} {
  func.func @kernel(%arg0: i32, %arg1: memref<1x8x32xf32, #tpu.memory_space<vmem>>, %arg2: memref<1x8x32xf32, #tpu.memory_space<vmem>>, %arg3: memref<8x32xf32, #tpu.memory_space<vmem>>, %arg4: memref<32x64xbf16, #tpu.memory_space<vmem>>, %arg5: memref<1x64xf32, #tpu.memory_space<vmem>>, %arg6: memref<32x32xbf16, #tpu.memory_space<vmem>>, %arg7: memref<32x32xbf16, #tpu.memory_space<vmem>>, %arg8: memref<32x64xbf16, #tpu.memory_space<vmem>>, %arg9: memref<1x64xf32, #tpu.memory_space<vmem>>, %arg10: memref<64x32xbf16, #tpu.memory_space<vmem>>, %arg11: memref<1x8x32xf32, #tpu.memory_space<vmem>>, %arg12: memref<1x8x8xbf16, #tpu.memory_space<vmem>>, %arg13: memref<8x32xbf16, #tpu.memory_space<vmem>>, %arg14: memref<1x8x8xf32, #tpu.memory_space<vmem>>) attributes {dimension_semantics = [#tpu.dimension_semantics<parallel>], iteration_bounds = array<i64: 2>, scalar_prefetch = 0 : i64, scratch_operands = 2 : i64, tpu.core_type = #tpu.core_type<tc>, window_params = [{transform_indices = @transform_0, window_bounds = array<i64: 1, 8, 32>}, {transform_indices = @transform_1, window_bounds = array<i64: 1, 8, 32>}, {pipeline_mode = #tpu.pipeline_mode<synchronous>, transform_indices = @transform_2, window_bounds = array<i64: 8, 32>}, {pipeline_mode = #tpu.pipeline_mode<synchronous>, transform_indices = @transform_3, window_bounds = array<i64: 32, 64>}, {pipeline_mode = #tpu.pipeline_mode<synchronous>, transform_indices = @transform_4, window_bounds = array<i64: 1, 64>}, {pipeline_mode = #tpu.pipeline_mode<synchronous>, transform_indices = @transform_5, window_bounds = array<i64: 32, 32>}, {pipeline_mode = #tpu.pipeline_mode<synchronous>, transform_indices = @transform_6, window_bounds = array<i64: 32, 32>}, {pipeline_mode = #tpu.pipeline_mode<synchronous>, transform_indices = @transform_7, window_bounds = array<i64: 32, 64>}, {pipeline_mode = #tpu.pipeline_mode<synchronous>, transform_indices = @transform_8, window_bounds = array<i64: 1, 64>}, {pipeline_mode = #tpu.pipeline_mode<synchronous>, transform_indices = @transform_9, window_bounds = array<i64: 64, 32>}, {transform_indices = @transform_10, window_bounds = array<i64: 1, 8, 32>}, {transform_indices = @transform_11, window_bounds = array<i64: 1, 8, 8>}]} {
    %c0 = arith.constant 0 : index
    %c0_0 = arith.constant 0 : index
    %c0_1 = arith.constant 0 : index
    %0 = vector.load %arg1[%c0, %c0_0, %c0_1] : memref<1x8x32xf32, #tpu.memory_space<vmem>>, vector<1x8x32xf32>
    %c0_2 = arith.constant 0 : index
    %c0_3 = arith.constant 0 : index
    %c0_4 = arith.constant 0 : index
    %1 = vector.load %arg2[%c0_2, %c0_3, %c0_4] : memref<1x8x32xf32, #tpu.memory_space<vmem>>, vector<1x8x32xf32>
    %c0_5 = arith.constant 0 : index
    %c0_6 = arith.constant 0 : index
    %2 = vector.load %arg3[%c0_5, %c0_6] : memref<8x32xf32, #tpu.memory_space<vmem>>, vector<8x32xf32>
    %3 = vector.extract_strided_slice %2 {offsets = [0, 0], sizes = [1, 32], strides = [1, 1]} : vector<8x32xf32> to vector<1x32xf32>
    %4 = vector.extract_strided_slice %2 {offsets = [1, 0], sizes = [1, 32], strides = [1, 1]} : vector<8x32xf32> to vector<1x32xf32>
    %5 = vector.extract_strided_slice %2 {offsets = [2, 0], sizes = [1, 32], strides = [1, 1]} : vector<8x32xf32> to vector<1x32xf32>
    %6 = vector.extract_strided_slice %2 {offsets = [3, 0], sizes = [1, 32], strides = [1, 1]} : vector<8x32xf32> to vector<1x32xf32>
    %7 = vector.extract_strided_slice %2 {offsets = [4, 0], sizes = [1, 32], strides = [1, 1]} : vector<8x32xf32> to vector<1x32xf32>
    %8 = vector.extract_strided_slice %2 {offsets = [5, 0], sizes = [1, 32], strides = [1, 1]} : vector<8x32xf32> to vector<1x32xf32>
    %9 = vector.extract_strided_slice %2 {offsets = [6, 0], sizes = [1, 32], strides = [1, 1]} : vector<8x32xf32> to vector<1x32xf32>
    %10 = vector.shape_cast %0 : vector<1x8x32xf32> to vector<8x32xf32>
    %11 = vector.shape_cast %1 : vector<1x8x32xf32> to vector<8x32xf32>
    %cst = arith.constant dense<0.000000e+00> : vector<8xf32>
    %12 = vector.multi_reduction <add>, %10, %cst [1] : vector<8x32xf32> to vector<8xf32>
    %13 = vector.shape_cast %12 : vector<8xf32> to vector<8x1xf32>
    %cst_7 = arith.constant 3.200000e+01 : f32
    %14 = vector.broadcast %cst_7 : f32 to vector<8x1xf32>
    %15 = arith.divf %13, %14 : vector<8x1xf32>
    %16 = arith.mulf %10, %10 : vector<8x32xf32>
    %cst_8 = arith.constant dense<0.000000e+00> : vector<8xf32>
    %17 = vector.multi_reduction <add>, %16, %cst_8 [1] : vector<8x32xf32> to vector<8xf32>
    %18 = vector.shape_cast %17 : vector<8xf32> to vector<8x1xf32>
    %cst_9 = arith.constant 3.200000e+01 : f32
    %19 = vector.broadcast %cst_9 : f32 to vector<8x1xf32>
    %20 = arith.divf %18, %19 : vector<8x1xf32>
    %21 = arith.mulf %15, %15 : vector<8x1xf32>
    %22 = arith.subf %20, %21 : vector<8x1xf32>
    %23 = vector.broadcast %15 : vector<8x1xf32> to vector<8x32xf32>
    %24 = arith.subf %10, %23 : vector<8x32xf32>
    %cst_10 = arith.constant 9.99999974E-6 : f32
    %25 = vector.broadcast %cst_10 : f32 to vector<8x1xf32>
    %26 = arith.addf %22, %25 : vector<8x1xf32>
    %27 = math.rsqrt %26 : vector<8x1xf32>
    %28 = vector.broadcast %27 : vector<8x1xf32> to vector<8x32xf32>
    %29 = arith.mulf %24, %28 : vector<8x32xf32>
    %30 = vector.broadcast %3 : vector<1x32xf32> to vector<8x32xf32>
    %31 = arith.mulf %29, %30 : vector<8x32xf32>
    %32 = vector.broadcast %4 : vector<1x32xf32> to vector<8x32xf32>
    %33 = arith.addf %31, %32 : vector<8x32xf32>
    %34 = arith.addf %33, %11 : vector<8x32xf32>
    %35 = arith.truncf %34 : vector<8x32xf32> to vector<8x32xbf16>
    %36 = arith.truncf %33 : vector<8x32xf32> to vector<8x32xbf16>
    %c0_11 = arith.constant 0 : index
    %c0_12 = arith.constant 0 : index
    %37 = vector.load %arg4[%c0_11, %c0_12] : memref<32x64xbf16, #tpu.memory_space<vmem>>, vector<32x64xbf16>
    %cst_13 = arith.constant dense<0.000000e+00> : vector<8x64xf32>
    %38 = tpu.matmul %35, %37, %cst_13 {dimension_numbers = #tpu.dot_dimension_numbers<[1], [0], [0], [1], [0, 0, 1, 1], [], []>} : vector<8x32xbf16>, vector<32x64xbf16>, vector<8x64xf32> -> vector<8x64xf32>
    %c0_14 = arith.constant 0 : index
    %c0_15 = arith.constant 0 : index
    %39 = vector.load %arg5[%c0_14, %c0_15] : memref<1x64xf32, #tpu.memory_space<vmem>>, vector<1x64xf32>
    %40 = vector.broadcast %39 : vector<1x64xf32> to vector<8x64xf32>
    %41 = arith.addf %38, %40 : vector<8x64xf32>
    %c0_16 = arith.constant 0 : index
    %c0_17 = arith.constant 0 : index
    %42 = vector.load %arg6[%c0_16, %c0_17] : memref<32x32xbf16, #tpu.memory_space<vmem>>, vector<32x32xbf16>
    %cst_18 = arith.constant dense<0.000000e+00> : vector<8x32xf32>
    %43 = tpu.matmul %36, %42, %cst_18 {dimension_numbers = #tpu.dot_dimension_numbers<[1], [0], [0], [1], [0, 0, 1, 1], [], []>} : vector<8x32xbf16>, vector<32x32xbf16>, vector<8x32xf32> -> vector<8x32xf32>
    %44 = vector.broadcast %5 : vector<1x32xf32> to vector<8x32xf32>
    %45 = arith.addf %43, %44 : vector<8x32xf32>
    %46 = vector.shape_cast %41 : vector<8x64xf32> to vector<1x8x64xf32>
    %47 = arith.truncf %46 : vector<1x8x64xf32> to vector<1x8x64xbf16>
    %48 = vector.shape_cast %45 : vector<8x32xf32> to vector<1x8x32xf32>
    %49 = arith.truncf %48 : vector<1x8x32xf32> to vector<1x8x32xbf16>
    %50 = vector.extract_strided_slice %47 {offsets = [0, 0, 0], sizes = [1, 8, 8], strides = [1, 1, 1]} : vector<1x8x64xbf16> to vector<1x8x8xbf16>
    %51 = vector.extract_strided_slice %47 {offsets = [0, 0, 32], sizes = [1, 8, 8], strides = [1, 1, 1]} : vector<1x8x64xbf16> to vector<1x8x8xbf16>
    %52 = vector.extract_strided_slice %49 {offsets = [0, 0, 0], sizes = [1, 8, 8], strides = [1, 1, 1]} : vector<1x8x32xbf16> to vector<1x8x8xbf16>
    "tpu.trace_start"() <{level = 10 : i32, message = "bqd,bkd->bqk"}> : () -> ()
    %cst_19 = arith.constant dense<0.000000e+00> : vector<1x8x8xf32>
    %53 = tpu.matmul %50, %51, %cst_19 {dimension_numbers = #tpu.dot_dimension_numbers<[2], [2], [1], [1], [0, 0, 0, 1, 1, 1], [0], [0]>} : vector<1x8x8xbf16>, vector<1x8x8xbf16>, vector<1x8x8xf32> -> vector<1x8x8xf32>
    "tpu.trace_stop"() : () -> ()
    %cst_20 = arith.constant dense<0xFF800000> : vector<1x8xf32>
    %54 = vector.multi_reduction <maximumf>, %53, %cst_20 [2] : vector<1x8x8xf32> to vector<1x8xf32>
    %55 = vector.shape_cast %54 : vector<1x8xf32> to vector<1x8x1xf32>
    %56 = vector.broadcast %55 : vector<1x8x1xf32> to vector<1x8x8xf32>
    %57 = arith.subf %53, %56 : vector<1x8x8xf32>
    %58 = math.exp %57 : vector<1x8x8xf32>
    %cst_21 = arith.constant dense<0.000000e+00> : vector<1x8xf32>
    %59 = vector.multi_reduction <add>, %58, %cst_21 [2] : vector<1x8x8xf32> to vector<1x8xf32>
    %60 = vector.shape_cast %59 : vector<1x8xf32> to vector<1x8x1xf32>
    %61 = tpu.reciprocal %60 : vector<1x8x1xf32> -> vector<1x8x1xf32>
    %62 = vector.broadcast %61 : vector<1x8x1xf32> to vector<1x8x8xf32>
    %63 = arith.mulf %58, %62 : vector<1x8x8xf32>
    %c0_22 = arith.constant 0 : index
    %c0_23 = arith.constant 0 : index
    %c0_24 = arith.constant 0 : index
    %64 = vector.load %arg14[%c0_22, %c0_23, %c0_24] : memref<1x8x8xf32, #tpu.memory_space<vmem>>, vector<1x8x8xf32>
    tpu.vector_store %arg14[%c0_22, %c0_23, %c0_24], %63 {strides = array<i32>} : memref<1x8x8xf32, #tpu.memory_space<vmem>>, vector<1x8x8xf32>,
    %65 = arith.truncf %63 : vector<1x8x8xf32> to vector<1x8x8xbf16>
    "tpu.trace_start"() <{level = 10 : i32, message = "bqk,bkd->bqd"}> : () -> ()
    %cst_25 = arith.constant dense<0.000000e+00> : vector<1x8x8xf32>
    %66 = tpu.matmul %65, %52, %cst_25 {dimension_numbers = #tpu.dot_dimension_numbers<[2], [1], [1], [2], [0, 0, 0, 1, 1, 2], [0], [0]>} : vector<1x8x8xbf16>, vector<1x8x8xbf16>, vector<1x8x8xf32> -> vector<1x8x8xf32>
    "tpu.trace_stop"() : () -> ()
    %67 = vector.shape_cast %66 : vector<1x8x8xf32> to vector<8x8xf32>
    %68 = arith.truncf %67 : vector<8x8xf32> to vector<8x8xbf16>
    %c0_26 = arith.constant 0 : index
    %c0_27 = arith.constant 0 : index
    %69 = vector.load %arg13[%c0_26, %c0_27] : memref<8x32xbf16, #tpu.memory_space<vmem>>, vector<8x8xbf16>
    tpu.vector_store %arg13[%c0_26, %c0_27], %68 {strides = array<i32>} : memref<8x32xbf16, #tpu.memory_space<vmem>>, vector<8x8xbf16>,
    %70 = vector.extract_strided_slice %47 {offsets = [0, 0, 8], sizes = [1, 8, 8], strides = [1, 1, 1]} : vector<1x8x64xbf16> to vector<1x8x8xbf16>
    %71 = vector.extract_strided_slice %47 {offsets = [0, 0, 40], sizes = [1, 8, 8], strides = [1, 1, 1]} : vector<1x8x64xbf16> to vector<1x8x8xbf16>
    %72 = vector.extract_strided_slice %49 {offsets = [0, 0, 8], sizes = [1, 8, 8], strides = [1, 1, 1]} : vector<1x8x32xbf16> to vector<1x8x8xbf16>
    "tpu.trace_start"() <{level = 10 : i32, message = "bqd,bkd->bqk"}> : () -> ()
    %cst_28 = arith.constant dense<0.000000e+00> : vector<1x8x8xf32>
    %73 = tpu.matmul %70, %71, %cst_28 {dimension_numbers = #tpu.dot_dimension_numbers<[2], [2], [1], [1], [0, 0, 0, 1, 1, 1], [0], [0]>} : vector<1x8x8xbf16>, vector<1x8x8xbf16>, vector<1x8x8xf32> -> vector<1x8x8xf32>
    "tpu.trace_stop"() : () -> ()
    %cst_29 = arith.constant dense<0xFF800000> : vector<1x8xf32>
    %74 = vector.multi_reduction <maximumf>, %73, %cst_29 [2] : vector<1x8x8xf32> to vector<1x8xf32>
    %75 = vector.shape_cast %74 : vector<1x8xf32> to vector<1x8x1xf32>
    %76 = vector.broadcast %75 : vector<1x8x1xf32> to vector<1x8x8xf32>
    %77 = arith.subf %73, %76 : vector<1x8x8xf32>
    %78 = math.exp %77 : vector<1x8x8xf32>
    %cst_30 = arith.constant dense<0.000000e+00> : vector<1x8xf32>
    %79 = vector.multi_reduction <add>, %78, %cst_30 [2] : vector<1x8x8xf32> to vector<1x8xf32>
    %80 = vector.shape_cast %79 : vector<1x8xf32> to vector<1x8x1xf32>
    %81 = tpu.reciprocal %80 : vector<1x8x1xf32> -> vector<1x8x1xf32>
    %82 = vector.broadcast %81 : vector<1x8x1xf32> to vector<1x8x8xf32>
    %83 = arith.mulf %78, %82 : vector<1x8x8xf32>
    %c0_31 = arith.constant 0 : index
    %c0_32 = arith.constant 0 : index
    %c0_33 = arith.constant 0 : index
    %84 = vector.load %arg14[%c0_31, %c0_32, %c0_33] : memref<1x8x8xf32, #tpu.memory_space<vmem>>, vector<1x8x8xf32>
    %85 = arith.addf %84, %83 : vector<1x8x8xf32>
    %c0_34 = arith.constant 0 : index
    %c0_35 = arith.constant 0 : index
    %c0_36 = arith.constant 0 : index
    %86 = vector.load %arg14[%c0_34, %c0_35, %c0_36] : memref<1x8x8xf32, #tpu.memory_space<vmem>>, vector<1x8x8xf32>
    tpu.vector_store %arg14[%c0_34, %c0_35, %c0_36], %85 {strides = array<i32>} : memref<1x8x8xf32, #tpu.memory_space<vmem>>, vector<1x8x8xf32>,
    %87 = arith.truncf %83 : vector<1x8x8xf32> to vector<1x8x8xbf16>
    "tpu.trace_start"() <{level = 10 : i32, message = "bqk,bkd->bqd"}> : () -> ()
    %cst_37 = arith.constant dense<0.000000e+00> : vector<1x8x8xf32>
    %88 = tpu.matmul %87, %72, %cst_37 {dimension_numbers = #tpu.dot_dimension_numbers<[2], [1], [1], [2], [0, 0, 0, 1, 1, 2], [0], [0]>} : vector<1x8x8xbf16>, vector<1x8x8xbf16>, vector<1x8x8xf32> -> vector<1x8x8xf32>
    "tpu.trace_stop"() : () -> ()
    %89 = vector.shape_cast %88 : vector<1x8x8xf32> to vector<8x8xf32>
    %90 = arith.truncf %89 : vector<8x8xf32> to vector<8x8xbf16>
    %c0_38 = arith.constant 0 : index
    %c8 = arith.constant 8 : index
    %91 = vector.load %arg13[%c0_38, %c8] : memref<8x32xbf16, #tpu.memory_space<vmem>>, vector<8x8xbf16>
    tpu.vector_store %arg13[%c0_38, %c8], %90 {strides = array<i32>} : memref<8x32xbf16, #tpu.memory_space<vmem>>, vector<8x8xbf16>,
    %92 = vector.extract_strided_slice %47 {offsets = [0, 0, 16], sizes = [1, 8, 8], strides = [1, 1, 1]} : vector<1x8x64xbf16> to vector<1x8x8xbf16>
    %93 = vector.extract_strided_slice %47 {offsets = [0, 0, 48], sizes = [1, 8, 8], strides = [1, 1, 1]} : vector<1x8x64xbf16> to vector<1x8x8xbf16>
    %94 = vector.extract_strided_slice %49 {offsets = [0, 0, 16], sizes = [1, 8, 8], strides = [1, 1, 1]} : vector<1x8x32xbf16> to vector<1x8x8xbf16>
    "tpu.trace_start"() <{level = 10 : i32, message = "bqd,bkd->bqk"}> : () -> ()
    %cst_39 = arith.constant dense<0.000000e+00> : vector<1x8x8xf32>
    %95 = tpu.matmul %92, %93, %cst_39 {dimension_numbers = #tpu.dot_dimension_numbers<[2], [2], [1], [1], [0, 0, 0, 1, 1, 1], [0], [0]>} : vector<1x8x8xbf16>, vector<1x8x8xbf16>, vector<1x8x8xf32> -> vector<1x8x8xf32>
    "tpu.trace_stop"() : () -> ()
    %cst_40 = arith.constant dense<0xFF800000> : vector<1x8xf32>
    %96 = vector.multi_reduction <maximumf>, %95, %cst_40 [2] : vector<1x8x8xf32> to vector<1x8xf32>
    %97 = vector.shape_cast %96 : vector<1x8xf32> to vector<1x8x1xf32>
    %98 = vector.broadcast %97 : vector<1x8x1xf32> to vector<1x8x8xf32>
    %99 = arith.subf %95, %98 : vector<1x8x8xf32>
    %100 = math.exp %99 : vector<1x8x8xf32>
    %cst_41 = arith.constant dense<0.000000e+00> : vector<1x8xf32>
    %101 = vector.multi_reduction <add>, %100, %cst_41 [2] : vector<1x8x8xf32> to vector<1x8xf32>
    %102 = vector.shape_cast %101 : vector<1x8xf32> to vector<1x8x1xf32>
    %103 = tpu.reciprocal %102 : vector<1x8x1xf32> -> vector<1x8x1xf32>
    %104 = vector.broadcast %103 : vector<1x8x1xf32> to vector<1x8x8xf32>
    %105 = arith.mulf %100, %104 : vector<1x8x8xf32>
    %c0_42 = arith.constant 0 : index
    %c0_43 = arith.constant 0 : index
    %c0_44 = arith.constant 0 : index
    %106 = vector.load %arg14[%c0_42, %c0_43, %c0_44] : memref<1x8x8xf32, #tpu.memory_space<vmem>>, vector<1x8x8xf32>
    %107 = arith.addf %106, %105 : vector<1x8x8xf32>
    %c0_45 = arith.constant 0 : index
    %c0_46 = arith.constant 0 : index
    %c0_47 = arith.constant 0 : index
    %108 = vector.load %arg14[%c0_45, %c0_46, %c0_47] : memref<1x8x8xf32, #tpu.memory_space<vmem>>, vector<1x8x8xf32>
    tpu.vector_store %arg14[%c0_45, %c0_46, %c0_47], %107 {strides = array<i32>} : memref<1x8x8xf32, #tpu.memory_space<vmem>>, vector<1x8x8xf32>,
    %109 = arith.truncf %105 : vector<1x8x8xf32> to vector<1x8x8xbf16>
    "tpu.trace_start"() <{level = 10 : i32, message = "bqk,bkd->bqd"}> : () -> ()
    %cst_48 = arith.constant dense<0.000000e+00> : vector<1x8x8xf32>
    %110 = tpu.matmul %109, %94, %cst_48 {dimension_numbers = #tpu.dot_dimension_numbers<[2], [1], [1], [2], [0, 0, 0, 1, 1, 2], [0], [0]>} : vector<1x8x8xbf16>, vector<1x8x8xbf16>, vector<1x8x8xf32> -> vector<1x8x8xf32>
    "tpu.trace_stop"() : () -> ()
    %111 = vector.shape_cast %110 : vector<1x8x8xf32> to vector<8x8xf32>
    %112 = arith.truncf %111 : vector<8x8xf32> to vector<8x8xbf16>
    %c0_49 = arith.constant 0 : index
    %c16 = arith.constant 16 : index
    %113 = vector.load %arg13[%c0_49, %c16] : memref<8x32xbf16, #tpu.memory_space<vmem>>, vector<8x8xbf16>
    tpu.vector_store %arg13[%c0_49, %c16], %112 {strides = array<i32>} : memref<8x32xbf16, #tpu.memory_space<vmem>>, vector<8x8xbf16>,
    %114 = vector.extract_strided_slice %47 {offsets = [0, 0, 24], sizes = [1, 8, 8], strides = [1, 1, 1]} : vector<1x8x64xbf16> to vector<1x8x8xbf16>
    %115 = vector.extract_strided_slice %47 {offsets = [0, 0, 56], sizes = [1, 8, 8], strides = [1, 1, 1]} : vector<1x8x64xbf16> to vector<1x8x8xbf16>
    %116 = vector.extract_strided_slice %49 {offsets = [0, 0, 24], sizes = [1, 8, 8], strides = [1, 1, 1]} : vector<1x8x32xbf16> to vector<1x8x8xbf16>
    "tpu.trace_start"() <{level = 10 : i32, message = "bqd,bkd->bqk"}> : () -> ()
    %cst_50 = arith.constant dense<0.000000e+00> : vector<1x8x8xf32>
    %117 = tpu.matmul %114, %115, %cst_50 {dimension_numbers = #tpu.dot_dimension_numbers<[2], [2], [1], [1], [0, 0, 0, 1, 1, 1], [0], [0]>} : vector<1x8x8xbf16>, vector<1x8x8xbf16>, vector<1x8x8xf32> -> vector<1x8x8xf32>
    "tpu.trace_stop"() : () -> ()
    %cst_51 = arith.constant dense<0xFF800000> : vector<1x8xf32>
    %118 = vector.multi_reduction <maximumf>, %117, %cst_51 [2] : vector<1x8x8xf32> to vector<1x8xf32>
    %119 = vector.shape_cast %118 : vector<1x8xf32> to vector<1x8x1xf32>
    %120 = vector.broadcast %119 : vector<1x8x1xf32> to vector<1x8x8xf32>
    %121 = arith.subf %117, %120 : vector<1x8x8xf32>
    %122 = math.exp %121 : vector<1x8x8xf32>
    %cst_52 = arith.constant dense<0.000000e+00> : vector<1x8xf32>
    %123 = vector.multi_reduction <add>, %122, %cst_52 [2] : vector<1x8x8xf32> to vector<1x8xf32>
    %124 = vector.shape_cast %123 : vector<1x8xf32> to vector<1x8x1xf32>
    %125 = tpu.reciprocal %124 : vector<1x8x1xf32> -> vector<1x8x1xf32>
    %126 = vector.broadcast %125 : vector<1x8x1xf32> to vector<1x8x8xf32>
    %127 = arith.mulf %122, %126 : vector<1x8x8xf32>
    %c0_53 = arith.constant 0 : index
    %c0_54 = arith.constant 0 : index
    %c0_55 = arith.constant 0 : index
    %128 = vector.load %arg14[%c0_53, %c0_54, %c0_55] : memref<1x8x8xf32, #tpu.memory_space<vmem>>, vector<1x8x8xf32>
    %129 = arith.addf %128, %127 : vector<1x8x8xf32>
    %c0_56 = arith.constant 0 : index
    %c0_57 = arith.constant 0 : index
    %c0_58 = arith.constant 0 : index
    %130 = vector.load %arg14[%c0_56, %c0_57, %c0_58] : memref<1x8x8xf32, #tpu.memory_space<vmem>>, vector<1x8x8xf32>
    tpu.vector_store %arg14[%c0_56, %c0_57, %c0_58], %129 {strides = array<i32>} : memref<1x8x8xf32, #tpu.memory_space<vmem>>, vector<1x8x8xf32>,
    %131 = arith.truncf %127 : vector<1x8x8xf32> to vector<1x8x8xbf16>
    "tpu.trace_start"() <{level = 10 : i32, message = "bqk,bkd->bqd"}> : () -> ()
    %cst_59 = arith.constant dense<0.000000e+00> : vector<1x8x8xf32>
    %132 = tpu.matmul %131, %116, %cst_59 {dimension_numbers = #tpu.dot_dimension_numbers<[2], [1], [1], [2], [0, 0, 0, 1, 1, 2], [0], [0]>} : vector<1x8x8xbf16>, vector<1x8x8xbf16>, vector<1x8x8xf32> -> vector<1x8x8xf32>
    "tpu.trace_stop"() : () -> ()
    %133 = vector.shape_cast %132 : vector<1x8x8xf32> to vector<8x8xf32>
    %134 = arith.truncf %133 : vector<8x8xf32> to vector<8x8xbf16>
    %c0_60 = arith.constant 0 : index
    %c24 = arith.constant 24 : index
    %135 = vector.load %arg13[%c0_60, %c24] : memref<8x32xbf16, #tpu.memory_space<vmem>>, vector<8x8xbf16>
    tpu.vector_store %arg13[%c0_60, %c24], %134 {strides = array<i32>} : memref<8x32xbf16, #tpu.memory_space<vmem>>, vector<8x8xbf16>,
    %c0_61 = arith.constant 0 : index
    %c0_62 = arith.constant 0 : index
    %136 = vector.load %arg13[%c0_61, %c0_62] : memref<8x32xbf16, #tpu.memory_space<vmem>>, vector<8x32xbf16>
    %c0_63 = arith.constant 0 : index
    %c0_64 = arith.constant 0 : index
    %137 = vector.load %arg7[%c0_63, %c0_64] : memref<32x32xbf16, #tpu.memory_space<vmem>>, vector<32x32xbf16>
    %cst_65 = arith.constant dense<0.000000e+00> : vector<8x32xf32>
    %138 = tpu.matmul %136, %137, %cst_65 {dimension_numbers = #tpu.dot_dimension_numbers<[1], [0], [0], [1], [0, 0, 1, 1], [], []>} : vector<8x32xbf16>, vector<32x32xbf16>, vector<8x32xf32> -> vector<8x32xf32>
    %139 = vector.broadcast %6 : vector<1x32xf32> to vector<8x32xf32>
    %140 = arith.addf %138, %139 : vector<8x32xf32>
    %141 = arith.addf %10, %140 : vector<8x32xf32>
    %cst_66 = arith.constant dense<0.000000e+00> : vector<8xf32>
    %142 = vector.multi_reduction <add>, %141, %cst_66 [1] : vector<8x32xf32> to vector<8xf32>
    %143 = vector.shape_cast %142 : vector<8xf32> to vector<8x1xf32>
    %cst_67 = arith.constant 3.200000e+01 : f32
    %144 = vector.broadcast %cst_67 : f32 to vector<8x1xf32>
    %145 = arith.divf %143, %144 : vector<8x1xf32>
    %146 = vector.broadcast %145 : vector<8x1xf32> to vector<8x32xf32>
    %147 = arith.subf %141, %146 : vector<8x32xf32>
    %148 = arith.mulf %147, %147 : vector<8x32xf32>
    %cst_68 = arith.constant dense<0.000000e+00> : vector<8xf32>
    %149 = vector.multi_reduction <add>, %148, %cst_68 [1] : vector<8x32xf32> to vector<8xf32>
    %150 = vector.shape_cast %149 : vector<8xf32> to vector<8x1xf32>
    %cst_69 = arith.constant 3.200000e+01 : f32
    %151 = vector.broadcast %cst_69 : f32 to vector<8x1xf32>
    %152 = arith.divf %150, %151 : vector<8x1xf32>
    %cst_70 = arith.constant 9.99999974E-6 : f32
    %153 = vector.broadcast %cst_70 : f32 to vector<8x1xf32>
    %154 = arith.addf %152, %153 : vector<8x1xf32>
    %155 = math.rsqrt %154 : vector<8x1xf32>
    %156 = vector.broadcast %155 : vector<8x1xf32> to vector<8x32xf32>
    %157 = arith.mulf %147, %156 : vector<8x32xf32>
    %158 = vector.broadcast %7 : vector<1x32xf32> to vector<8x32xf32>
    %159 = arith.mulf %157, %158 : vector<8x32xf32>
    %160 = vector.broadcast %8 : vector<1x32xf32> to vector<8x32xf32>
    %161 = arith.addf %159, %160 : vector<8x32xf32>
    %162 = arith.truncf %161 : vector<8x32xf32> to vector<8x32xbf16>
    %c0_71 = arith.constant 0 : index
    %c0_72 = arith.constant 0 : index
    %163 = vector.load %arg9[%c0_71, %c0_72] : memref<1x64xf32, #tpu.memory_space<vmem>>, vector<1x64xf32>
    %c0_73 = arith.constant 0 : index
    %c0_74 = arith.constant 0 : index
    %164 = vector.load %arg8[%c0_73, %c0_74] : memref<32x64xbf16, #tpu.memory_space<vmem>>, vector<32x64xbf16>
    %cst_75 = arith.constant dense<0.000000e+00> : vector<8x64xf32>
    %165 = tpu.matmul %162, %164, %cst_75 {dimension_numbers = #tpu.dot_dimension_numbers<[1], [0], [0], [1], [0, 0, 1, 1], [], []>} : vector<8x32xbf16>, vector<32x64xbf16>, vector<8x64xf32> -> vector<8x64xf32>
    %166 = vector.broadcast %163 : vector<1x64xf32> to vector<8x64xf32>
    %167 = arith.addf %165, %166 : vector<8x64xf32>
    %cst_76 = arith.constant 0.000000e+00 : f32
    %168 = vector.broadcast %cst_76 : f32 to vector<8x64xf32>
    %169 = arith.maximumf %167, %168 : vector<8x64xf32>
    %170 = arith.truncf %169 : vector<8x64xf32> to vector<8x64xbf16>
    %c0_77 = arith.constant 0 : index
    %c0_78 = arith.constant 0 : index
    %171 = vector.load %arg10[%c0_77, %c0_78] : memref<64x32xbf16, #tpu.memory_space<vmem>>, vector<64x32xbf16>
    %cst_79 = arith.constant dense<0.000000e+00> : vector<8x32xf32>
    %172 = tpu.matmul %170, %171, %cst_79 {dimension_numbers = #tpu.dot_dimension_numbers<[1], [0], [0], [1], [0, 0, 1, 1], [], []>} : vector<8x64xbf16>, vector<64x32xbf16>, vector<8x32xf32> -> vector<8x32xf32>
    %173 = arith.addf %141, %172 : vector<8x32xf32>
    %174 = vector.broadcast %9 : vector<1x32xf32> to vector<8x32xf32>
    %175 = arith.addf %173, %174 : vector<8x32xf32>
    %176 = vector.shape_cast %175 : vector<8x32xf32> to vector<1x8x32xf32>
    %c0_80 = arith.constant 0 : index
    %c0_81 = arith.constant 0 : index
    %c0_82 = arith.constant 0 : index
    %177 = vector.load %arg11[%c0_80, %c0_81, %c0_82] : memref<1x8x32xf32, #tpu.memory_space<vmem>>, vector<1x8x32xf32>
    tpu.vector_store %arg11[%c0_80, %c0_81, %c0_82], %176 {strides = array<i32>} : memref<1x8x32xf32, #tpu.memory_space<vmem>>, vector<1x8x32xf32>,
    %c0_83 = arith.constant 0 : index
    %c0_84 = arith.constant 0 : index
    %c0_85 = arith.constant 0 : index
    %178 = vector.load %arg14[%c0_83, %c0_84, %c0_85] : memref<1x8x8xf32, #tpu.memory_space<vmem>>, vector<1x8x8xf32>
    %cst_86 = arith.constant 2.500000e-01 : f32
    %179 = vector.broadcast %cst_86 : f32 to vector<1x8x8xf32>
    %180 = arith.mulf %178, %179 : vector<1x8x8xf32>
    %181 = arith.truncf %180 : vector<1x8x8xf32> to vector<1x8x8xbf16>
    %c0_87 = arith.constant 0 : index
    %c0_88 = arith.constant 0 : index
    %c0_89 = arith.constant 0 : index
    %182 = vector.load %arg12[%c0_87, %c0_88, %c0_89] : memref<1x8x8xbf16, #tpu.memory_space<vmem>>, vector<1x8x8xbf16>
    tpu.vector_store %arg12[%c0_87, %c0_88, %c0_89], %181 {strides = array<i32>} : memref<1x8x8xbf16, #tpu.memory_space<vmem>>, vector<1x8x8xbf16>,
    return
  }
  func.func @transform_0(%arg0: i32) -> (i32, i32, i32) {
    %c0_i32 = arith.constant 0 : i32
    %c0_i32_0 = arith.constant 0 : i32
    %c0_i32_1 = arith.constant 0 : i32
    return %arg0, %c0_i32, %c0_i32_0 : i32, i32, i32
  }
  func.func @transform_1(%arg0: i32) -> (i32, i32, i32) {
    %c0_i32 = arith.constant 0 : i32
    %c0_i32_0 = arith.constant 0 : i32
    %c0_i32_1 = arith.constant 0 : i32
    return %arg0, %c0_i32, %c0_i32_0 : i32, i32, i32
  }
  func.func @transform_2(%arg0: i32) -> (i32, i32) {
    %c0_i32 = arith.constant 0 : i32
    %c0_i32_0 = arith.constant 0 : i32
    %c0_i32_1 = arith.constant 0 : i32
    return %c0_i32, %c0_i32_0 : i32, i32
  }
  func.func @transform_3(%arg0: i32) -> (i32, i32) {
    %c0_i32 = arith.constant 0 : i32
    %c0_i32_0 = arith.constant 0 : i32
    %c0_i32_1 = arith.constant 0 : i32
    return %c0_i32, %c0_i32_0 : i32, i32
  }
  func.func @transform_4(%arg0: i32) -> (i32, i32) {
    %c0_i32 = arith.constant 0 : i32
    %c0_i32_0 = arith.constant 0 : i32
    %c0_i32_1 = arith.constant 0 : i32
    return %c0_i32, %c0_i32_0 : i32, i32
  }
  func.func @transform_5(%arg0: i32) -> (i32, i32) {
    %c0_i32 = arith.constant 0 : i32
    %c0_i32_0 = arith.constant 0 : i32
    %c0_i32_1 = arith.constant 0 : i32
    return %c0_i32, %c0_i32_0 : i32, i32
  }
  func.func @transform_6(%arg0: i32) -> (i32, i32) {
    %c0_i32 = arith.constant 0 : i32
    %c0_i32_0 = arith.constant 0 : i32
    %c0_i32_1 = arith.constant 0 : i32
    return %c0_i32, %c0_i32_0 : i32, i32
  }
  func.func @transform_7(%arg0: i32) -> (i32, i32) {
    %c0_i32 = arith.constant 0 : i32
    %c0_i32_0 = arith.constant 0 : i32
    %c0_i32_1 = arith.constant 0 : i32
    return %c0_i32, %c0_i32_0 : i32, i32
  }
  func.func @transform_8(%arg0: i32) -> (i32, i32) {
    %c0_i32 = arith.constant 0 : i32
    %c0_i32_0 = arith.constant 0 : i32
    %c0_i32_1 = arith.constant 0 : i32
    return %c0_i32, %c0_i32_0 : i32, i32
  }
  func.func @transform_9(%arg0: i32) -> (i32, i32) {
    %c0_i32 = arith.constant 0 : i32
    %c0_i32_0 = arith.constant 0 : i32
    %c0_i32_1 = arith.constant 0 : i32
    return %c0_i32, %c0_i32_0 : i32, i32
  }
  func.func @transform_10(%arg0: i32) -> (i32, i32, i32) {
    %c0_i32 = arith.constant 0 : i32
    %c0_i32_0 = arith.constant 0 : i32
    %c0_i32_1 = arith.constant 0 : i32
    return %arg0, %c0_i32, %c0_i32_0 : i32, i32, i32
  }
  func.func @transform_11(%arg0: i32) -> (i32, i32, i32) {
    %c0_i32 = arith.constant 0 : i32
    %c0_i32_0 = arith.constant 0 : i32
    %c0_i32_1 = arith.constant 0 : i32
    return %arg0, %c0_i32, %c0_i32_0 : i32, i32, i32
  }
}

</mosaic_0001>

<llo_original>
// kernel: tpu_custom_call.1
$region0: #{tpu_custom_call.1}
  #allocation0 [shape = 'u32[]', space=smem, size = 0x4, offset = 0x4, fixed_abs, tag = 'smem constant byte address 0x4 - core index']
  #allocation1 [shape = 'u32[144,128]{1,0:T(1,128)}', space=vmem, size = 0x12000, scoped, tag = 'internal scratch']
  #allocation2 [shape = 'bf16[8,32]{1,0:T(8,128)(2,1)}', space=vmem, size = 0x800, scoped, tag = 'scratch operand']
  #allocation3 [shape = 'f32[1,8,8]{2,1,0:T(8,128)}', space=vmem, size = 0x1000, scoped, tag = 'scratch operand']
  %s0 = inlined_call_operand.vmem [shape: f32[2,8,32], index: 0, kind: input, shape index: {}]
  %s1 = inlined_call_operand.vmem [shape: f32[2,8,32], index: 1, kind: input, shape index: {}]
  %s2 = inlined_call_operand.hbm [shape: f32[8,32], index: 2, kind: input, shape index: {}]
  %s3 = inlined_call_operand.vmem [shape: bf16[32,64], index: 3, kind: input, shape index: {}]
  %s4 = inlined_call_operand.vmem [shape: f32[1,64], index: 4, kind: input, shape index: {}]
  %s5 = inlined_call_operand.hbm [shape: bf16[32,32], index: 5, kind: input, shape index: {}]
  %s6 = inlined_call_operand.hbm [shape: bf16[32,32], index: 6, kind: input, shape index: {}]
  %s7 = inlined_call_operand.hbm [shape: bf16[32,64], index: 7, kind: input, shape index: {}]
  %s8 = inlined_call_operand.vmem [shape: f32[1,64], index: 8, kind: input, shape index: {}]
  %s9 = inlined_call_operand.vmem [shape: bf16[64,32], index: 9, kind: input, shape index: {}]
  %s10 = inlined_call_operand.hbm [shape: f32[2,8,32], index: 10, kind: output, shape index: {0}]
  %s11 = inlined_call_operand.hbm [shape: bf16[2,8,8], index: 11, kind: output, shape index: {1}]
  %12 = xla_tuple %s10, %s11
  %s13 = sld [smem:[#allocation0]]
  $region97: #{tpu_custom_call.1} parent=0
    _
  %s15 = ssub.s32 1, %s13
  %s16 = scalar_select 0, %s15, %s13
  $region1: #{tpu_custom_call.1} parent=0
    #allocation4 [shape = 'u8[4096]{0}', space=vmem, size = 0x1000, scoped, tag = 'input window, operand 2, single buffered']
    #allocation5 [shape = 's32[2]{0}', space=sflag, size = 0x8, scoped, tag = 'scoped memory for tpu_custom_call.1']
    #allocation6 [shape = 's32[2]{0}', space=sflag, size = 0x8, scoped, tag = 'scoped memory for tpu_custom_call.1']
    #allocation7 [shape = 'u8[8192]{0}', space=vmem, size = 0x2000, scoped, tag = 'input window, operand 5, single buffered']
    #allocation8 [shape = 's32[1]{0}', space=sflag, size = 0x4, scoped, tag = 'scoped memory for tpu_custom_call.1']
    #allocation9 [shape = 'u8[8192]{0}', space=vmem, size = 0x2000, scoped, tag = 'input window, operand 6, single buffered']
    #allocation10 [shape = 'u8[8192]{0}', space=vmem, size = 0x2000, scoped, tag = 'input window, operand 7, single buffered']
    #allocation11 [shape = 's32[1]{0}', space=sflag, size = 0x4, scoped, tag = 'scoped memory for tpu_custom_call.1']
    #allocation12 [shape = 'u8[8192]{0}', space=vmem, size = 0x2000, scoped, tag = 'output window, operand 0']
    #allocation13 [shape = 'u8[4096]{0}', space=vmem, size = 0x1000, scoped, tag = 'output window, operand 1']
    #allocation14 [shape = 's32[2]{0}', space=sflag, size = 0x8, scoped, tag = 'scoped memory for tpu_custom_call.1']
    %17 = vsyncpa [#allocation5], 0
    %18 = vsyncpa [#allocation8], 0
    %19 = vsyncpa [#allocation11], 0
    %20 = vsyncpa [#allocation6], 0
    %s21 = scalar_lea.sflag [#allocation6], 1
    %22 = vsyncpa %s21, 0
    %23 = vsyncpa [#allocation14], 0
    %s24 = scalar_lea.sflag [#allocation14], 1
    %25 = vsyncpa %s24, 0
    loop: start=0, step=1, limit=4
    $region2: #{tpu_custom_call.1} parent=1 // loop_pre_header
      _
    $region3: #{tpu_custom_call.1} parent=1 // loop_header
      %s27 = sphi 0, %s31
      %p28 = scmp.ge.s32.totalorder %s27, 4
      %s37 = sphi 0, %s39
      %s40 = sphi 0, %s37
      %s41 = sphi 0, %s40
      %s57 = sphi 0, %s41
      %s63 = sphi 0, %s65
      %s66 = sphi 0, %s63
      %s67 = sphi 0, %s66
      %s83 = sphi 0, %s67
      %s87 = sphi 0, %s87
      %s89 = sphi 0, %s87
      %s90 = sphi 0, %s89
      %s104 = sphi 0, %s90
      %s108 = sphi 0, %s108
      %s110 = sphi 0, %s108
      %s111 = sphi 0, %s110
      %s125 = sphi 0, %s111
      %s129 = sphi 0, %s129
      %s131 = sphi 0, %s129
      %s132 = sphi 0, %s131
      %s146 = sphi 0, %s132
      %s150 = sphi 0, %s150
      %s152 = sphi 0, %s150
      %s153 = sphi 0, %s152
      %s167 = sphi 0, %s153
      %s171 = sphi 0, %s171
      %s173 = sphi 0, %s171
      %s174 = sphi 0, %s173
      %s188 = sphi 0, %s174
      %s192 = sphi 0, %s192
      %s194 = sphi 0, %s192
      %s195 = sphi 0, %s194
      %s209 = sphi 0, %s195
      %s213 = sphi 0, %s213
      %s215 = sphi 0, %s213
      %s216 = sphi 0, %s215
      %s230 = sphi 0, %s216
      %s234 = sphi 0, %s234
      %s236 = sphi 0, %s234
      %s237 = sphi 0, %s236
      %s251 = sphi 0, %s237
      %s257 = sphi 0, %s259
      %s260 = sphi 0, %s257
      %s261 = sphi 0, %s260
      %s277 = sphi 0, %s261
      %s283 = sphi 0, %s285
      %s286 = sphi 0, %s283
      %s287 = sphi 0, %s286
      %s303 = sphi 0, %s287
    $region4: #{tpu_custom_call.1} parent=1 // loop_header_branch
      %30 = sbr.rel (%p28) target = $region8
    $region5: #{tpu_custom_call.1} parent=1 // loop_body
      %s32 = ssub.s32 %s27, 1
      %s33 = ssub.s32 %s27, 2
      %s34 = sadd.s32 %s27, 1
      %s35 = ssub.s32 %s27, %s34
      %p36 = scmp.eq.s32.totalorder %s35, 0
      %s38 = sadd.s32 %s37, 1
      %s39 = scalar_select %p36, %s37, %s38
      %p42 = pneg %p36
      %p43 = scmp.eq.s32.totalorder %s27, 1
      %p44 = por %p42, %p43
      %p45 = scmp.ne.s32.totalorder %s37, %s40
      %p46 = scmp.eq.s32.totalorder %s27, 0
      %p47 = por %p45, %p46
      %p48 = scmp.ne.s32.totalorder %s37, %s40
      %p49 = scmp.eq.s32.totalorder %s32, 1
      %p50 = por %p48, %p49
      %p51 = scmp.ne.s32.totalorder %s40, %s41
      %p52 = scmp.eq.s32.totalorder %s32, 0
      %p53 = por %p51, %p52
      %p54 = scmp.ne.s32.totalorder %s40, %s41
      %p55 = scmp.eq.s32.totalorder %s33, 1
      %p56 = por %p54, %p55
      %p58 = scmp.ne.s32.totalorder %s41, %s57
      %p59 = scmp.eq.s32.totalorder %s33, 0
      %p60 = por %p58, %p59
      %s61 = ssub.s32 %s27, %s34
      %p62 = scmp.eq.s32.totalorder %s61, 0
      %s64 = sadd.s32 %s63, 1
      %s65 = scalar_select %p62, %s63, %s64
      %p68 = pneg %p62
      %p69 = scmp.eq.s32.totalorder %s27, 1
      %p70 = por %p68, %p69
      %p71 = scmp.ne.s32.totalorder %s63, %s66
      %p72 = scmp.eq.s32.totalorder %s27, 0
      %p73 = por %p71, %p72
      %p74 = scmp.ne.s32.totalorder %s63, %s66
      %p75 = scmp.eq.s32.totalorder %s32, 1
      %p76 = por %p74, %p75
      %p77 = scmp.ne.s32.totalorder %s66, %s67
      %p78 = scmp.eq.s32.totalorder %s32, 0
      %p79 = por %p77, %p78
      %p80 = scmp.ne.s32.totalorder %s66, %s67
      %p81 = scmp.eq.s32.totalorder %s33, 1
      %p82 = por %p80, %p81
      %p84 = scmp.ne.s32.totalorder %s67, %s83
      %p85 = scmp.eq.s32.totalorder %s33, 0
      %p86 = por %p84, %p85
      %s88 = sadd.s32 %s87, 1
      %p91 = scmp.eq.s32.totalorder %s27, 1
      %p92 = scmp.ne.s32.totalorder %s87, %s89
      %p93 = scmp.eq.s32.totalorder %s27, 0
      %p94 = por %p92, %p93
      %p95 = scmp.ne.s32.totalorder %s87, %s89
      %p96 = scmp.eq.s32.totalorder %s32, 1
      %p97 = por %p95, %p96
      %p98 = scmp.ne.s32.totalorder %s89, %s90
      %p99 = scmp.eq.s32.totalorder %s32, 0
      %p100 = por %p98, %p99
      %p101 = scmp.ne.s32.totalorder %s89, %s90
      %p102 = scmp.eq.s32.totalorder %s33, 1
      %p103 = por %p101, %p102
      %p105 = scmp.ne.s32.totalorder %s90, %s104
      %p106 = scmp.eq.s32.totalorder %s33, 0
      %p107 = por %p105, %p106
      %s109 = sadd.s32 %s108, 1
      %p112 = scmp.eq.s32.totalorder %s27, 1
      %p113 = scmp.ne.s32.totalorder %s108, %s110
      %p114 = scmp.eq.s32.totalorder %s27, 0
      %p115 = por %p113, %p114
      %p116 = scmp.ne.s32.totalorder %s108, %s110
      %p117 = scmp.eq.s32.totalorder %s32, 1
      %p118 = por %p116, %p117
      %p119 = scmp.ne.s32.totalorder %s110, %s111
      %p120 = scmp.eq.s32.totalorder %s32, 0
      %p121 = por %p119, %p120
      %p122 = scmp.ne.s32.totalorder %s110, %s111
      %p123 = scmp.eq.s32.totalorder %s33, 1
      %p124 = por %p122, %p123
      %p126 = scmp.ne.s32.totalorder %s111, %s125
      %p127 = scmp.eq.s32.totalorder %s33, 0
      %p128 = por %p126, %p127
      %s130 = sadd.s32 %s129, 1
      %p133 = scmp.eq.s32.totalorder %s27, 1
      %p134 = scmp.ne.s32.totalorder %s129, %s131
      %p135 = scmp.eq.s32.totalorder %s27, 0
      %p136 = por %p134, %p135
      %p137 = scmp.ne.s32.totalorder %s129, %s131
      %p138 = scmp.eq.s32.totalorder %s32, 1
      %p139 = por %p137, %p138
      %p140 = scmp.ne.s32.totalorder %s131, %s132
      %p141 = scmp.eq.s32.totalorder %s32, 0
      %p142 = por %p140, %p141
      %p143 = scmp.ne.s32.totalorder %s131, %s132
      %p144 = scmp.eq.s32.totalorder %s33, 1
      %p145 = por %p143, %p144
      %p147 = scmp.ne.s32.totalorder %s132, %s146
      %p148 = scmp.eq.s32.totalorder %s33, 0
      %p149 = por %p147, %p148
      %s151 = sadd.s32 %s150, 1
      %p154 = scmp.eq.s32.totalorder %s27, 1
      %p155 = scmp.ne.s32.totalorder %s150, %s152
      %p156 = scmp.eq.s32.totalorder %s27, 0
      %p157 = por %p155, %p156
      %p158 = scmp.ne.s32.totalorder %s150, %s152
      %p159 = scmp.eq.s32.totalorder %s32, 1
      %p160 = por %p158, %p159
      %p161 = scmp.ne.s32.totalorder %s152, %s153
      %p162 = scmp.eq.s32.totalorder %s32, 0
      %p163 = por %p161, %p162
      %p164 = scmp.ne.s32.totalorder %s152, %s153
      %p165 = scmp.eq.s32.totalorder %s33, 1
      %p166 = por %p164, %p165
      %p168 = scmp.ne.s32.totalorder %s153, %s167
      %p169 = scmp.eq.s32.totalorder %s33, 0
      %p170 = por %p168, %p169
      %s172 = sadd.s32 %s171, 1
      %p175 = scmp.eq.s32.totalorder %s27, 1
      %p176 = scmp.ne.s32.totalorder %s171, %s173
      %p177 = scmp.eq.s32.totalorder %s27, 0
      %p178 = por %p176, %p177
      %p179 = scmp.ne.s32.totalorder %s171, %s173
      %p180 = scmp.eq.s32.totalorder %s32, 1
      %p181 = por %p179, %p180
      %p182 = scmp.ne.s32.totalorder %s173, %s174
      %p183 = scmp.eq.s32.totalorder %s32, 0
      %p184 = por %p182, %p183
      %p185 = scmp.ne.s32.totalorder %s173, %s174
      %p186 = scmp.eq.s32.totalorder %s33, 1
      %p187 = por %p185, %p186
      %p189 = scmp.ne.s32.totalorder %s174, %s188
      %p190 = scmp.eq.s32.totalorder %s33, 0
      %p191 = por %p189, %p190
      %s193 = sadd.s32 %s192, 1
      %p196 = scmp.eq.s32.totalorder %s27, 1
      %p197 = scmp.ne.s32.totalorder %s192, %s194
      %p198 = scmp.eq.s32.totalorder %s27, 0
      %p199 = por %p197, %p198
      %p200 = scmp.ne.s32.totalorder %s192, %s194
      %p201 = scmp.eq.s32.totalorder %s32, 1
      %p202 = por %p200, %p201
      %p203 = scmp.ne.s32.totalorder %s194, %s195
      %p204 = scmp.eq.s32.totalorder %s32, 0
      %p205 = por %p203, %p204
      %p206 = scmp.ne.s32.totalorder %s194, %s195
      %p207 = scmp.eq.s32.totalorder %s33, 1
      %p208 = por %p206, %p207
      %p210 = scmp.ne.s32.totalorder %s195, %s209
      %p211 = scmp.eq.s32.totalorder %s33, 0
      %p212 = por %p210, %p211
      %s214 = sadd.s32 %s213, 1
      %p217 = scmp.eq.s32.totalorder %s27, 1
      %p218 = scmp.ne.s32.totalorder %s213, %s215
      %p219 = scmp.eq.s32.totalorder %s27, 0
      %p220 = por %p218, %p219
      %p221 = scmp.ne.s32.totalorder %s213, %s215
      %p222 = scmp.eq.s32.totalorder %s32, 1
      %p223 = por %p221, %p222
      %p224 = scmp.ne.s32.totalorder %s215, %s216
      %p225 = scmp.eq.s32.totalorder %s32, 0
      %p226 = por %p224, %p225
      %p227 = scmp.ne.s32.totalorder %s215, %s216
      %p228 = scmp.eq.s32.totalorder %s33, 1
      %p229 = por %p227, %p228
      %p231 = scmp.ne.s32.totalorder %s216, %s230
      %p232 = scmp.eq.s32.totalorder %s33, 0
      %p233 = por %p231, %p232
      %s235 = sadd.s32 %s234, 1
      %p238 = scmp.eq.s32.totalorder %s27, 1
      %p239 = scmp.ne.s32.totalorder %s234, %s236
      %p240 = scmp.eq.s32.totalorder %s27, 0
      %p241 = por %p239, %p240
      %p242 = scmp.ne.s32.totalorder %s234, %s236
      %p243 = scmp.eq.s32.totalorder %s32, 1
      %p244 = por %p242, %p243
      %p245 = scmp.ne.s32.totalorder %s236, %s237
      %p246 = scmp.eq.s32.totalorder %s32, 0
      %p247 = por %p245, %p246
      %p248 = scmp.ne.s32.totalorder %s236, %s237
      %p249 = scmp.eq.s32.totalorder %s33, 1
      %p250 = por %p248, %p249
      %p252 = scmp.ne.s32.totalorder %s237, %s251
      %p253 = scmp.eq.s32.totalorder %s33, 0
      %p254 = por %p252, %p253
      %s255 = ssub.s32 %s27, %s34
      %p256 = scmp.eq.s32.totalorder %s255, 0
      %s258 = sadd.s32 %s257, 1
      %s259 = scalar_select %p256, %s257, %s258
      %p262 = pneg %p256
      %p263 = scmp.eq.s32.totalorder %s27, 1
      %p264 = por %p262, %p263
      %p265 = scmp.ne.s32.totalorder %s257, %s260
      %p266 = scmp.eq.s32.totalorder %s27, 0
      %p267 = por %p265, %p266
      %p268 = scmp.ne.s32.totalorder %s257, %s260
      %p269 = scmp.eq.s32.totalorder %s32, 1
      %p270 = por %p268, %p269
      %p271 = scmp.ne.s32.totalorder %s260, %s261
      %p272 = scmp.eq.s32.totalorder %s32, 0
      %p273 = por %p271, %p272
      %p274 = scmp.ne.s32.totalorder %s260, %s261
      %p275 = scmp.eq.s32.totalorder %s33, 1
      %p276 = por %p274, %p275
      %p278 = scmp.ne.s32.totalorder %s261, %s277
      %p279 = scmp.eq.s32.totalorder %s33, 0
      %p280 = por %p278, %p279
      %s281 = ssub.s32 %s27, %s34
      %p282 = scmp.eq.s32.totalorder %s281, 0
      %s284 = sadd.s32 %s283, 1
      %s285 = scalar_select %p282, %s283, %s284
      %p288 = pneg %p282
      %p289 = scmp.eq.s32.totalorder %s27, 1
      %p290 = por %p288, %p289
      %p291 = scmp.ne.s32.totalorder %s283, %s286
      %p292 = scmp.eq.s32.totalorder %s27, 0
      %p293 = por %p291, %p292
      %p294 = scmp.ne.s32.totalorder %s283, %s286
      %p295 = scmp.eq.s32.totalorder %s32, 1
      %p296 = por %p294, %p295
      %p297 = scmp.ne.s32.totalorder %s286, %s287
      %p298 = scmp.eq.s32.totalorder %s32, 0
      %p299 = por %p297, %p298
      %p300 = scmp.ne.s32.totalorder %s286, %s287
      %p301 = scmp.eq.s32.totalorder %s33, 1
      %p302 = por %p300, %p301
      %p304 = scmp.ne.s32.totalorder %s287, %s303
      %p305 = scmp.eq.s32.totalorder %s33, 0
      %p306 = por %p304, %p305
      %p307 = scmp.le.s32.totalorder 1, %s27
      %p308 = scmp.lt.s32.totalorder %s27, 3
      %p309 = pnand %p307, %p308
      %p310 = pneg %p309
      // Predicated region
      $region9: #{tpu_custom_call.1} parent=5 // pred_check
        _
      $region10: #{tpu_custom_call.1} parent=5 // pred_check_branch
        %312 = sbr.rel (%p309) target = $region12
      $region11: #{tpu_custom_call.1} parent=5 // pred_region
        %s313 = ssub.s32 %s27, 1
        // Predicated region
        $region13: #{tpu_custom_call.1} parent=11 // pred_check
          %p314 = pneg %p100
        $region14: #{tpu_custom_call.1} parent=11 // pred_check_branch
          %316 = sbr.rel (%p314) target = $region16
        $region15: #{tpu_custom_call.1} parent=11 // pred_region
          %s318 = ssub.s32 128, 128
          %319 = vsyncadd [#allocation5], %s318
          %s321 = sshll.u32 [#allocation4], 4
          %s322 = int_to_ptr.vmem [resolvable:$true] %s321
          %324 = dma.hbm_to_vmem [thread:$0]  %s2, 128, %s322, [#allocation5]
        $region16: #{tpu_custom_call.1} parent=11 // pred_fallthru
          _
        // Predicated region
        $region17: #{tpu_custom_call.1} parent=11 // pred_check
          %p325 = pneg %p121
        $region18: #{tpu_custom_call.1} parent=11 // pred_check_branch
          %327 = sbr.rel (%p325) target = $region20
        $region19: #{tpu_custom_call.1} parent=11 // pred_region
          _
        $region20: #{tpu_custom_call.1} parent=11 // pred_fallthru
          _
        // Predicated region
        $region21: #{tpu_custom_call.1} parent=11 // pred_check
          %p328 = pneg %p142
        $region22: #{tpu_custom_call.1} parent=11 // pred_check_branch
          %330 = sbr.rel (%p328) target = $region24
        $region23: #{tpu_custom_call.1} parent=11 // pred_region
          _
        $region24: #{tpu_custom_call.1} parent=11 // pred_fallthru
          _
        // Predicated region
        $region25: #{tpu_custom_call.1} parent=11 // pred_check
          %p331 = pneg %p163
        $region26: #{tpu_custom_call.1} parent=11 // pred_check_branch
          %333 = sbr.rel (%p331) target = $region28
        $region27: #{tpu_custom_call.1} parent=11 // pred_region
          %s335 = ssub.s32 256, 256
          %336 = vsyncadd [#allocation8], %s335
          %s337 = sshll.u32 [#allocation7], 4
          %s338 = int_to_ptr.vmem [resolvable:$true] %s337
          %343 = dma.hbm_to_vmem [thread:$0]  %s5, 256, %s338, [#allocation8], 64, 64, 4
        $region28: #{tpu_custom_call.1} parent=11 // pred_fallthru
          _
        // Predicated region
        $region29: #{tpu_custom_call.1} parent=11 // pred_check
          %p344 = pneg %p184
        $region30: #{tpu_custom_call.1} parent=11 // pred_check_branch
          %346 = sbr.rel (%p344) target = $region32
        $region31: #{tpu_custom_call.1} parent=11 // pred_region
          %s348 = ssub.s32 256, 256
          %349 = vsyncadd [#allocation8], %s348
          %s350 = sshll.u32 [#allocation9], 4
          %s351 = int_to_ptr.vmem [resolvable:$true] %s350
          %356 = dma.hbm_to_vmem [thread:$0]  %s6, 256, %s351, [#allocation8], 64, 64, 4
        $region32: #{tpu_custom_call.1} parent=11 // pred_fallthru
          _
        // Predicated region
        $region33: #{tpu_custom_call.1} parent=11 // pred_check
          %p357 = pneg %p205
        $region34: #{tpu_custom_call.1} parent=11 // pred_check_branch
          %359 = sbr.rel (%p357) target = $region36
        $region35: #{tpu_custom_call.1} parent=11 // pred_region
          %s361 = ssub.s32 256, 256
          %362 = vsyncadd [#allocation11], %s361
          %s363 = sshll.u32 [#allocation10], 4
          %s364 = int_to_ptr.vmem [resolvable:$true] %s363
          %369 = dma.hbm_to_vmem [thread:$0]  %s7, 256, %s364, [#allocation11], 64, 64, 4
        $region36: #{tpu_custom_call.1} parent=11 // pred_fallthru
          _
        // Predicated region
        $region37: #{tpu_custom_call.1} parent=11 // pred_check
          %p370 = pneg %p226
        $region38: #{tpu_custom_call.1} parent=11 // pred_check_branch
          %372 = sbr.rel (%p370) target = $region40
        $region39: #{tpu_custom_call.1} parent=11 // pred_region
          _
        $region40: #{tpu_custom_call.1} parent=11 // pred_fallthru
          _
        // Predicated region
        $region41: #{tpu_custom_call.1} parent=11 // pred_check
          %p373 = pneg %p247
        $region42: #{tpu_custom_call.1} parent=11 // pred_check_branch
          %375 = sbr.rel (%p373) target = $region44
        $region43: #{tpu_custom_call.1} parent=11 // pred_region
          _
        $region44: #{tpu_custom_call.1} parent=11 // pred_fallthru
          _
      $region12: #{tpu_custom_call.1} parent=5 // pred_fallthru
        _
      %p376 = scmp.lt.s32.totalorder %s27, 2
      // Predicated region
      $region45: #{tpu_custom_call.1} parent=5 // pred_check
        %p377 = pneg %p376
      $region46: #{tpu_custom_call.1} parent=5 // pred_check_branch
        %379 = sbr.rel (%p377) target = $region48
      $region47: #{tpu_custom_call.1} parent=5 // pred_region
        // Predicated region
        $region49: #{tpu_custom_call.1} parent=47 // pred_check
          %p380 = pneg %p47
        $region50: #{tpu_custom_call.1} parent=47 // pred_check_branch
          %382 = sbr.rel (%p380) target = $region52
        $region51: #{tpu_custom_call.1} parent=47 // pred_region
          %p383 = scmp.lt.s32.totalorder %s27, 1
          %s384 = scalar_select %p383, %s27, 1
          %s385 = smul.addr %s384, 8
          %s386 = scalar_lea.vmem %s0, %s385
        $region52: #{tpu_custom_call.1} parent=47 // pred_fallthru
          _
        // Predicated region
        $region53: #{tpu_custom_call.1} parent=47 // pred_check
          %p387 = pneg %p73
        $region54: #{tpu_custom_call.1} parent=47 // pred_check_branch
          %389 = sbr.rel (%p387) target = $region56
        $region55: #{tpu_custom_call.1} parent=47 // pred_region
          %p390 = scmp.lt.s32.totalorder %s27, 1
          %s391 = scalar_select %p390, %s27, 1
          %s392 = smul.addr %s391, 8
          %s393 = scalar_lea.vmem %s1, %s392
        $region56: #{tpu_custom_call.1} parent=47 // pred_fallthru
          _
      $region48: #{tpu_custom_call.1} parent=5 // pred_fallthru
        _
      %p394 = scmp.le.s32.totalorder 1, %s27
      %p395 = scmp.lt.s32.totalorder %s27, 3
      %p396 = pnand %p394, %p395
      %p397 = pneg %p396
      // Predicated region
      $region57: #{tpu_custom_call.1} parent=5 // pred_check
        _
      $region58: #{tpu_custom_call.1} parent=5 // pred_check_branch
        %399 = sbr.rel (%p396) target = $region60
      $region59: #{tpu_custom_call.1} parent=5 // pred_region
        %s400 = ssub.s32 %s27, 1
        // Predicated region
        $region61: #{tpu_custom_call.1} parent=59 // pred_check
          %p401 = pneg %p100
        $region62: #{tpu_custom_call.1} parent=59 // pred_check_branch
          %403 = sbr.rel (%p401) target = $region64
        $region63: #{tpu_custom_call.1} parent=59 // pred_region
          %404 = dma.done [#allocation5], 128
        $region64: #{tpu_custom_call.1} parent=59 // pred_fallthru
          _
        // Predicated region
        $region65: #{tpu_custom_call.1} parent=59 // pred_check
          %p405 = pneg %p163
        $region66: #{tpu_custom_call.1} parent=59 // pred_check_branch
          %407 = sbr.rel (%p405) target = $region68
        $region67: #{tpu_custom_call.1} parent=59 // pred_region
          %408 = dma.done [#allocation8], 256
        $region68: #{tpu_custom_call.1} parent=59 // pred_fallthru
          _
        // Predicated region
        $region69: #{tpu_custom_call.1} parent=59 // pred_check
          %p409 = pneg %p184
        $region70: #{tpu_custom_call.1} parent=59 // pred_check_branch
          %411 = sbr.rel (%p409) target = $region72
        $region71: #{tpu_custom_call.1} parent=59 // pred_region
          %412 = dma.done [#allocation8], 256
        $region72: #{tpu_custom_call.1} parent=59 // pred_fallthru
          _
        // Predicated region
        $region73: #{tpu_custom_call.1} parent=59 // pred_check
          %p413 = pneg %p205
        $region74: #{tpu_custom_call.1} parent=59 // pred_check_branch
          %415 = sbr.rel (%p413) target = $region76
        $region75: #{tpu_custom_call.1} parent=59 // pred_region
          %416 = dma.done [#allocation11], 256
        $region76: #{tpu_custom_call.1} parent=59 // pred_fallthru
          _
        %p417 = scmp.lt.s32.totalorder %s32, 1
        %s418 = scalar_select %p417, %s32, 1
        %s419 = smul.addr %s418, 8
        %s420 = scalar_lea.vmem %s0, %s419
        %p421 = pneg %p53
        %p422 = pneg %p50
        %p423 = scmp.lt.s32.totalorder %s32, 1
        %s424 = scalar_select %p423, %s32, 1
        %s425 = smul.addr %s424, 8
        %s426 = scalar_lea.vmem %s1, %s425
        %p427 = pneg %p79
        %p428 = pneg %p76
        %p429 = pneg %p100
        %p430 = pneg %p97
        %p431 = pneg %p121
        %p432 = pneg %p118
        %p433 = pneg %p142
        %p434 = pneg %p139
        %p435 = pneg %p163
        %p436 = pneg %p160
        %p437 = pneg %p184
        %p438 = pneg %p181
        %p439 = pneg %p205
        %p440 = pneg %p202
        %p441 = pneg %p226
        %p442 = pneg %p223
        %p443 = pneg %p247
        %p444 = pneg %p244
        %p445 = pneg %p273
        %p446 = pneg %p270
        %s447 = sand.u32 %s260, 1
        %s448 = scalar_lea.sflag [#allocation6], %s447
        %s449 = sand.u32 %s260, 1
        %s450 = smul.addr %s449, 8
        %s451 = scalar_lea.vmem [#allocation12], %s450
        %p452 = pneg %p299
        %p453 = pneg %p296
        %s454 = sand.u32 %s286, 1
        %s455 = scalar_lea.sflag [#allocation14], %s454
        %s456 = sand.u32 %s286, 1
        %s457 = smul.addr %s456, 4
        %s458 = scalar_lea.vmem [#allocation13], %s457
        %p459 = scmp.lt.s32.totalorder %s32, 1
        %s460 = scalar_select %p459, %s32, 1
        %s461 = smul.addr %s460, 8
        %s462 = scalar_lea.vmem %s0, %s461
        %p463 = scmp.lt.s32.totalorder %s32, 1
        %s464 = scalar_select %p463, %s32, 1
        %s465 = smul.addr %s464, 8
        %s466 = scalar_lea.vmem %s1, %s465
        %v468 = vld [vmem:[%s462] sm:$0xff]
        %v469 = vld [vmem:[%s466] sm:$0xff]
        %v470 = vld [vmem:[#allocation4] sm:$0xff]
        %vm471 = vcmask 261120
        %v472 = vsel %vm471, %v468, 0.0
        %473 = vadd.xlane.f32.xlu0 %v472
        %v474 = vpop.xlane.xlu0 %473
        %v475 = vrcp.pop 32.0
        %v476 = vmul.f32 %v474, %v475
        %v477 = vmul.f32 %v468, %v468
        %v478 = vsel %vm471, %v477, 0.0
        %479 = vadd.xlane.f32.xlu0 %v478
        %v480 = vpop.xlane.xlu0 %479
        %v481 = vmul.f32 %v480, %v475
        %v482 = vmul.f32 %v476, %v476
        %v483 = vsub.f32 %v481, %v482
        %v484 = vsub.f32 %v468, %v476
        %v485 = vadd.f32 %v483, 1e-05
        %v486 = vrsqrt.pop %v485
        %v487 = vmul.f32 %v484, %v486
        %v488 = vlaneseq
        %v489 = vshrl.u32 %v488, 7
        %v490 = vsub.s32 0, %v489
        %v491 = vrot.slane %v470, %v490
        %v492 = vmul.f32 %v487, %v491
        %v493 = vlaneseq
        %v494 = vshrl.u32 %v493, 7
        %v495 = vsub.s32 1, %v494
        %v496 = vrot.slane %v470, %v495
        %v497 = vadd.f32 %v492, %v496
        %v498 = vadd.f32 %v497, %v469
        %v499 = vpack.c.bf16 %v498, %v498
        %v500 = vpack.c.bf16 %v497, %v497
        %v501 = vld [vmem:[%s3] sm:$0xf]
        %v502 = vld [vmem:[%s3 + $0x4] sm:$0xf]
        %v503 = vld [vmem:[%s3 + $0x8] sm:$0xf]
        %v504 = vld [vmem:[%s3 + $0xc] sm:$0xf]
        %v505 = vld [vmem:[%s4] sm:$0x1]
        %v507 = vlaneseq
        %v508 = vshrl.u32 %v507, 7
        %v509 = vsub.s32 0, %v508
        %v510 = vrot.slane %v505, %v509
        %v516 = vunpack.c.l.b16 %v501
        %v517 = vunpack.c.l.b16 %v502
        %v518 = vunpack.c.l.b16 %v503
        %v519 = vunpack.c.l.b16 %v504
        %v520 = vpack.c.b16 %v517, %v516
        %v521 = vpack.c.b16 %v519, %v518
        %v525 = vsel %vm471, %v499, 0
        %527 = vmatprep.subr.bf16.mxu0 0
        %528 = vmatpush1.bf16.msra.mxu0 %v520
        %529 = vmatprep.subr.bf16.mxu0 0
        %530 = vmatpush1.bf16.msra.mxu0 %v521
        %531 = vmatprep.subr.bf16.mxu0 0
        %532 = vmatpush1.bf16.msra.mxu0 0
        %533 = vmatprep.subr.bf16.mxu0 0
        %534 = vmatpush1.bf16.msra.mxu0 0
        %535 = vmatprep.subr.bf16.mxu0 0
        %536 = vmatpush1.bf16.msra.mxu0 0
        %537 = vmatprep.subr.bf16.mxu0 0
        %538 = vmatpush1.bf16.msra.mxu0 0
        %539 = vmatprep.subr.bf16.mxu0 0
        %540 = vmatpush1.bf16.msra.mxu0 0
        %541 = vmatprep.subr.bf16.mxu0 0
        %542 = vmatpush1.bf16.msra.mxu0 0
        %543 = vmatprep.subr.bf16.mxu0 0
        %544 = vmatpush1.bf16.msra.mxu0 0
        %545 = vmatprep.subr.bf16.mxu0 0
        %546 = vmatpush1.bf16.msra.mxu0 0
        %547 = vmatprep.subr.bf16.mxu0 0
        %548 = vmatpush1.bf16.msra.mxu0 0
        %549 = vmatprep.subr.bf16.mxu0 0
        %550 = vmatpush1.bf16.msra.mxu0 0
        %551 = vmatprep.subr.bf16.mxu0 0
        %552 = vmatpush1.bf16.msra.mxu0 0
        %553 = vmatprep.subr.bf16.mxu0 0
        %554 = vmatpush1.bf16.msra.mxu0 0
        %555 = vmatprep.subr.bf16.mxu0 0
        %556 = vmatpush1.bf16.msra.mxu0 0
        %557 = vmatprep.subr.bf16.mxu0 0
        %558 = vmatpush1.bf16.msra.mxu0 0
        %559 = vmatprep.mubr.bf16.mxu0 0
        %560 = vmatmul.mubr.bf16.gmra.mrb[0].mxu0 %v525
        %v561 = vpop.f32.mrb[0].mxu0
        %v562 = vadd.f32 %v510, %v561
        %v563 = vpop.f32.mrb[0].mxu0
        %v564 = vpop.f32.mrb[0].mxu0
        %v565 = vpop.f32.mrb[0].mxu0
        %566 = vdwg.mxu0
        %v567 = vld [vmem:[#allocation7] sm:$0xf]
        %v568 = vld [vmem:[#allocation7 + $0x4] sm:$0xf]
        %v569 = vld [vmem:[#allocation7 + $0x8] sm:$0xf]
        %v570 = vld [vmem:[#allocation7 + $0xc] sm:$0xf]
        %v571 = vlaneseq
        %v572 = vshrl.u32 %v571, 7
        %v573 = vsub.s32 2, %v572
        %v574 = vrot.slane %v470, %v573
        %v579 = vunpack.c.l.b16 %v567
        %v580 = vunpack.c.l.b16 %v568
        %v581 = vunpack.c.l.b16 %v569
        %v582 = vunpack.c.l.b16 %v570
        %v583 = vpack.c.b16 %v580, %v579
        %v584 = vpack.c.b16 %v582, %v581
        %v588 = vsel %vm471, %v500, 0
        %590 = vmatprep.subr.bf16.mxu0 0
        %591 = vmatpush1.bf16.msra.mxu0 %v583
        %592 = vmatprep.subr.bf16.mxu0 0
        %593 = vmatpush1.bf16.msra.mxu0 %v584
        %594 = vmatprep.subr.bf16.mxu0 0
        %595 = vmatpush1.bf16.msra.mxu0 0
        %596 = vmatprep.subr.bf16.mxu0 0
        %597 = vmatpush1.bf16.msra.mxu0 0
        %598 = vmatprep.subr.bf16.mxu0 0
        %599 = vmatpush1.bf16.msra.mxu0 0
        %600 = vmatprep.subr.bf16.mxu0 0
        %601 = vmatpush1.bf16.msra.mxu0 0
        %602 = vmatprep.subr.bf16.mxu0 0
        %603 = vmatpush1.bf16.msra.mxu0 0
        %604 = vmatprep.subr.bf16.mxu0 0
        %605 = vmatpush1.bf16.msra.mxu0 0
        %606 = vmatprep.subr.bf16.mxu0 0
        %607 = vmatpush1.bf16.msra.mxu0 0
        %608 = vmatprep.subr.bf16.mxu0 0
        %609 = vmatpush1.bf16.msra.mxu0 0
        %610 = vmatprep.subr.bf16.mxu0 0
        %611 = vmatpush1.bf16.msra.mxu0 0
        %612 = vmatprep.subr.bf16.mxu0 0
        %613 = vmatpush1.bf16.msra.mxu0 0
        %614 = vmatprep.subr.bf16.mxu0 0
        %615 = vmatpush1.bf16.msra.mxu0 0
        %616 = vmatprep.subr.bf16.mxu0 0
        %617 = vmatpush1.bf16.msra.mxu0 0
        %618 = vmatprep.subr.bf16.mxu0 0
        %619 = vmatpush1.bf16.msra.mxu0 0
        %620 = vmatprep.subr.bf16.mxu0 0
        %621 = vmatpush1.bf16.msra.mxu0 0
        %622 = vmatprep.mubr.bf16.mxu0 0
        %623 = vmatmul.mubr.bf16.gmra.mrb[0].mxu0 %v588
        %v624 = vpop.f32.mrb[0].mxu0
        %v625 = vadd.f32 %v574, %v624
        %v626 = vpop.f32.mrb[0].mxu0
        %v627 = vpop.f32.mrb[0].mxu0
        %v628 = vpop.f32.mrb[0].mxu0
        %629 = vdwg.mxu0
        %v630 = vpack.c.bf16 %v562, %v562
        %v631 = vpack.c.bf16 %v625, %v625
        %633 = vrot.lane.b32.xlu0 %v630, 96
        %v634 = vpop.permute.xlu0 %633
        %vm635 = vcmask 64512
        %v637 = vsel %vm635, %v630, 0
        %v640 = vsel %vm635, %v634, 0
        %642 = vmatprep.subr.bf16.mxu0 0
        %643 = vmatpush1.bf16.xpose.msra.mxu0 %v640
        %644 = vmatprep.subr.bf16.mxu0 0
        %645 = vmatpush1.bf16.xpose.msra.mxu0 0
        %646 = vmatprep.subr.bf16.mxu0 0
        %647 = vmatpush1.bf16.xpose.msra.mxu0 0
        %648 = vmatprep.subr.bf16.mxu0 0
        %649 = vmatpush1.bf16.xpose.msra.mxu0 0
        %650 = vmatprep.subr.bf16.mxu0 0
        %651 = vmatpush1.bf16.xpose.msra.mxu0 0
        %652 = vmatprep.subr.bf16.mxu0 0
        %653 = vmatpush1.bf16.xpose.msra.mxu0 0
        %654 = vmatprep.subr.bf16.mxu0 0
        %655 = vmatpush1.bf16.xpose.msra.mxu0 0
        %656 = vmatprep.subr.bf16.mxu0 0
        %657 = vmatpush1.bf16.xpose.msra.mxu0 0
        %658 = vmatprep.subr.bf16.mxu0 0
        %659 = vmatpush1.bf16.xpose.msra.mxu0 0
        %660 = vmatprep.subr.bf16.mxu0 0
        %661 = vmatpush1.bf16.xpose.msra.mxu0 0
        %662 = vmatprep.subr.bf16.mxu0 0
        %663 = vmatpush1.bf16.xpose.msra.mxu0 0
        %664 = vmatprep.subr.bf16.mxu0 0
        %665 = vmatpush1.bf16.xpose.msra.mxu0 0
        %666 = vmatprep.subr.bf16.mxu0 0
        %667 = vmatpush1.bf16.xpose.msra.mxu0 0
        %668 = vmatprep.subr.bf16.mxu0 0
        %669 = vmatpush1.bf16.xpose.msra.mxu0 0
        %670 = vmatprep.subr.bf16.mxu0 0
        %671 = vmatpush1.bf16.xpose.msra.mxu0 0
        %672 = vmatprep.subr.bf16.mxu0 0
        %673 = vmatpush1.bf16.xpose.msra.mxu0 0
        %674 = vmatprep.mubr.bf16.mxu0 0
        %675 = vmatmul.mubr.bf16.gmra.mrb[0].mxu0 %v637
        %v676 = vpop.f32.mrb[0].mxu0
        %v677 = vadd.f32 0.0, %v676
        %v678 = vpop.f32.mrb[0].mxu0
        %v679 = vpop.f32.mrb[0].mxu0
        %v680 = vpop.f32.mrb[0].mxu0
        %681 = vdwg.mxu0
        %v682 = vsel %vm635, %v677, -inf
        %683 = vmax.xlane.f32.xlu0 %v682
        %v684 = vpop.xlane.xlu0 %683
        %v685 = vsub.f32 %v677, %v684
        %v686 = vmul.f32 %v685, 1.442695
        %v687 = vpow.pop %v686
        %v688 = vsel %vm635, %v687, 0.0
        %689 = vadd.xlane.f32.xlu0 %v688
        %v690 = vpop.xlane.xlu0 %689
        %v691 = vrcp.pop %v690
        %v692 = vmul.f32 %v687, %v691
        %693 = vst.msk [vmem:[#allocation3] sm:$0xff] %vm635, %v692
        %v694 = vpack.c.bf16 %v692, %v692
        %v696 = vsel %vm635, %v694, 0
        %vm698 = vcmask 1043456
        %v700 = vsel %vm698, %v631, 0
        %702 = vmatprep.subr.bf16.mxu0 0
        %703 = vmatpush1.bf16.msra.mxu0 %v700
        %704 = vmatprep.subr.bf16.mxu0 0
        %705 = vmatpush1.bf16.msra.mxu0 0
        %706 = vmatprep.subr.bf16.mxu0 0
        %707 = vmatpush1.bf16.msra.mxu0 0
        %708 = vmatprep.subr.bf16.mxu0 0
        %709 = vmatpush1.bf16.msra.mxu0 0
        %710 = vmatprep.subr.bf16.mxu0 0
        %711 = vmatpush1.bf16.msra.mxu0 0
        %712 = vmatprep.subr.bf16.mxu0 0
        %713 = vmatpush1.bf16.msra.mxu0 0
        %714 = vmatprep.subr.bf16.mxu0 0
        %715 = vmatpush1.bf16.msra.mxu0 0
        %716 = vmatprep.subr.bf16.mxu0 0
        %717 = vmatpush1.bf16.msra.mxu0 0
        %718 = vmatprep.subr.bf16.mxu0 0
        %719 = vmatpush1.bf16.msra.mxu0 0
        %720 = vmatprep.subr.bf16.mxu0 0
        %721 = vmatpush1.bf16.msra.mxu0 0
        %722 = vmatprep.subr.bf16.mxu0 0
        %723 = vmatpush1.bf16.msra.mxu0 0
        %724 = vmatprep.subr.bf16.mxu0 0
        %725 = vmatpush1.bf16.msra.mxu0 0
        %726 = vmatprep.subr.bf16.mxu0 0
        %727 = vmatpush1.bf16.msra.mxu0 0
        %728 = vmatprep.subr.bf16.mxu0 0
        %729 = vmatpush1.bf16.msra.mxu0 0
        %730 = vmatprep.subr.bf16.mxu0 0
        %731 = vmatpush1.bf16.msra.mxu0 0
        %732 = vmatprep.subr.bf16.mxu0 0
        %733 = vmatpush1.bf16.msra.mxu0 0
        %734 = vmatprep.mubr.bf16.mxu0 0
        %735 = vmatmul.mubr.bf16.gmra.mrb[0].mxu0 %v696
        %v736 = vpop.f32.mrb[0].mxu0
        %v737 = vadd.f32 0.0, %v736
        %v738 = vpop.f32.mrb[0].mxu0
        %v739 = vpop.f32.mrb[0].mxu0
        %v740 = vpop.f32.mrb[0].mxu0
        %741 = vdwg.mxu0
        %v742 = vpack.c.bf16 %v737, %v737
        %vm743 = vcmask 60416
        %744 = vst.msk [vmem:[#allocation2] sm:$0xf] %vm743, %v742
        %745 = vrot.lane.b32.xlu0 %v630, 120
        %v746 = vpop.permute.xlu0 %745
        %747 = vrot.lane.b32.xlu0 %v630, 88
        %v748 = vpop.permute.xlu0 %747
        %v750 = vsel %vm635, %v746, 0
        %v753 = vsel %vm635, %v748, 0
        %755 = vmatprep.subr.bf16.mxu0 0
        %756 = vmatpush1.bf16.xpose.msra.mxu0 %v753
        %757 = vmatprep.subr.bf16.mxu0 0
        %758 = vmatpush1.bf16.xpose.msra.mxu0 0
        %759 = vmatprep.subr.bf16.mxu0 0
        %760 = vmatpush1.bf16.xpose.msra.mxu0 0
        %761 = vmatprep.subr.bf16.mxu0 0
        %762 = vmatpush1.bf16.xpose.msra.mxu0 0
        %763 = vmatprep.subr.bf16.mxu0 0
        %764 = vmatpush1.bf16.xpose.msra.mxu0 0
        %765 = vmatprep.subr.bf16.mxu0 0
        %766 = vmatpush1.bf16.xpose.msra.mxu0 0
        %767 = vmatprep.subr.bf16.mxu0 0
        %768 = vmatpush1.bf16.xpose.msra.mxu0 0
        %769 = vmatprep.subr.bf16.mxu0 0
        %770 = vmatpush1.bf16.xpose.msra.mxu0 0
        %771 = vmatprep.subr.bf16.mxu0 0
        %772 = vmatpush1.bf16.xpose.msra.mxu0 0
        %773 = vmatprep.subr.bf16.mxu0 0
        %774 = vmatpush1.bf16.xpose.msra.mxu0 0
        %775 = vmatprep.subr.bf16.mxu0 0
        %776 = vmatpush1.bf16.xpose.msra.mxu0 0
        %777 = vmatprep.subr.bf16.mxu0 0
        %778 = vmatpush1.bf16.xpose.msra.mxu0 0
        %779 = vmatprep.subr.bf16.mxu0 0
        %780 = vmatpush1.bf16.xpose.msra.mxu0 0
        %781 = vmatprep.subr.bf16.mxu0 0
        %782 = vmatpush1.bf16.xpose.msra.mxu0 0
        %783 = vmatprep.subr.bf16.mxu0 0
        %784 = vmatpush1.bf16.xpose.msra.mxu0 0
        %785 = vmatprep.subr.bf16.mxu0 0
        %786 = vmatpush1.bf16.xpose.msra.mxu0 0
        %787 = vmatprep.mubr.bf16.mxu0 0
        %788 = vmatmul.mubr.bf16.gmra.mrb[0].mxu0 %v750
        %v789 = vpop.f32.mrb[0].mxu0
        %v790 = vadd.f32 0.0, %v789
        %v791 = vpop.f32.mrb[0].mxu0
        %v792 = vpop.f32.mrb[0].mxu0
        %v793 = vpop.f32.mrb[0].mxu0
        %794 = vdwg.mxu0
        %v795 = vsel %vm635, %v790, -inf
        %796 = vmax.xlane.f32.xlu0 %v795
        %v797 = vpop.xlane.xlu0 %796
        %v798 = vsub.f32 %v790, %v797
        %v799 = vmul.f32 %v798, 1.442695
        %v800 = vpow.pop %v799
        %v801 = vsel %vm635, %v800, 0.0
        %802 = vadd.xlane.f32.xlu0 %v801
        %v803 = vpop.xlane.xlu0 %802
        %v804 = vrcp.pop %v803
        %v805 = vmul.f32 %v800, %v804
        %v806 = vld [vmem:[#allocation3] sm:$0xff]
        %v807 = vadd.f32 %v806, %v805
        %808 = vst.msk [vmem:[#allocation3] sm:$0xff] %vm635, %v807
        %v809 = vpack.c.bf16 %v805, %v805
        %811 = vrot.lane.b32.xlu0 %v631, 120
        %v812 = vpop.permute.xlu0 %811
        %v814 = vsel %vm635, %v809, 0
        %v817 = vsel %vm698, %v812, 0
        %819 = vmatprep.subr.bf16.mxu0 0
        %820 = vmatpush1.bf16.msra.mxu0 %v817
        %821 = vmatprep.subr.bf16.mxu0 0
        %822 = vmatpush1.bf16.msra.mxu0 0
        %823 = vmatprep.subr.bf16.mxu0 0
        %824 = vmatpush1.bf16.msra.mxu0 0
        %825 = vmatprep.subr.bf16.mxu0 0
        %826 = vmatpush1.bf16.msra.mxu0 0
        %827 = vmatprep.subr.bf16.mxu0 0
        %828 = vmatpush1.bf16.msra.mxu0 0
        %829 = vmatprep.subr.bf16.mxu0 0
        %830 = vmatpush1.bf16.msra.mxu0 0
        %831 = vmatprep.subr.bf16.mxu0 0
        %832 = vmatpush1.bf16.msra.mxu0 0
        %833 = vmatprep.subr.bf16.mxu0 0
        %834 = vmatpush1.bf16.msra.mxu0 0
        %835 = vmatprep.subr.bf16.mxu0 0
        %836 = vmatpush1.bf16.msra.mxu0 0
        %837 = vmatprep.subr.bf16.mxu0 0
        %838 = vmatpush1.bf16.msra.mxu0 0
        %839 = vmatprep.subr.bf16.mxu0 0
        %840 = vmatpush1.bf16.msra.mxu0 0
        %841 = vmatprep.subr.bf16.mxu0 0
        %842 = vmatpush1.bf16.msra.mxu0 0
        %843 = vmatprep.subr.bf16.mxu0 0
        %844 = vmatpush1.bf16.msra.mxu0 0
        %845 = vmatprep.subr.bf16.mxu0 0
        %846 = vmatpush1.bf16.msra.mxu0 0
        %847 = vmatprep.subr.bf16.mxu0 0
        %848 = vmatpush1.bf16.msra.mxu0 0
        %849 = vmatprep.subr.bf16.mxu0 0
        %850 = vmatpush1.bf16.msra.mxu0 0
        %851 = vmatprep.mubr.bf16.mxu0 0
        %852 = vmatmul.mubr.bf16.gmra.mrb[0].mxu0 %v814
        %v853 = vpop.f32.mrb[0].mxu0
        %v854 = vadd.f32 0.0, %v853
        %v855 = vpop.f32.mrb[0].mxu0
        %v856 = vpop.f32.mrb[0].mxu0
        %v857 = vpop.f32.mrb[0].mxu0
        %858 = vdwg.mxu0
        %v859 = vpack.c.bf16 %v854, %v854
        %v861 = vunpack.c.l.b16 %v859
        %v862 = vpack.c.b16 %v861, %v861
        %863 = vrot.lane.b32.xlu0 %v862, 8
        %v864 = vpop.permute.xlu0 %863
        %vm866 = vcmask 126016
        %867 = vst.msk [vmem:[#allocation2] sm:$0xf] %vm866, %v864
        %868 = vrot.lane.b32.xlu0 %v630, 112
        %v869 = vpop.permute.xlu0 %868
        %870 = vrot.lane.b32.xlu0 %v630, 80
        %v871 = vpop.permute.xlu0 %870
        %v873 = vsel %vm635, %v869, 0
        %v876 = vsel %vm635, %v871, 0
        %878 = vmatprep.subr.bf16.mxu0 0
        %879 = vmatpush1.bf16.xpose.msra.mxu0 %v876
        %880 = vmatprep.subr.bf16.mxu0 0
        %881 = vmatpush1.bf16.xpose.msra.mxu0 0
        %882 = vmatprep.subr.bf16.mxu0 0
        %883 = vmatpush1.bf16.xpose.msra.mxu0 0
        %884 = vmatprep.subr.bf16.mxu0 0
        %885 = vmatpush1.bf16.xpose.msra.mxu0 0
        %886 = vmatprep.subr.bf16.mxu0 0
        %887 = vmatpush1.bf16.xpose.msra.mxu0 0
        %888 = vmatprep.subr.bf16.mxu0 0
        %889 = vmatpush1.bf16.xpose.msra.mxu0 0
        %890 = vmatprep.subr.bf16.mxu0 0
        %891 = vmatpush1.bf16.xpose.msra.mxu0 0
        %892 = vmatprep.subr.bf16.mxu0 0
        %893 = vmatpush1.bf16.xpose.msra.mxu0 0
        %894 = vmatprep.subr.bf16.mxu0 0
        %895 = vmatpush1.bf16.xpose.msra.mxu0 0
        %896 = vmatprep.subr.bf16.mxu0 0
        %897 = vmatpush1.bf16.xpose.msra.mxu0 0
        %898 = vmatprep.subr.bf16.mxu0 0
        %899 = vmatpush1.bf16.xpose.msra.mxu0 0
        %900 = vmatprep.subr.bf16.mxu0 0
        %901 = vmatpush1.bf16.xpose.msra.mxu0 0
        %902 = vmatprep.subr.bf16.mxu0 0
        %903 = vmatpush1.bf16.xpose.msra.mxu0 0
        %904 = vmatprep.subr.bf16.mxu0 0
        %905 = vmatpush1.bf16.xpose.msra.mxu0 0
        %906 = vmatprep.subr.bf16.mxu0 0
        %907 = vmatpush1.bf16.xpose.msra.mxu0 0
        %908 = vmatprep.subr.bf16.mxu0 0
        %909 = vmatpush1.bf16.xpose.msra.mxu0 0
        %910 = vmatprep.mubr.bf16.mxu0 0
        %911 = vmatmul.mubr.bf16.gmra.mrb[0].mxu0 %v873
        %v912 = vpop.f32.mrb[0].mxu0
        %v913 = vadd.f32 0.0, %v912
        %v914 = vpop.f32.mrb[0].mxu0
        %v915 = vpop.f32.mrb[0].mxu0
        %v916 = vpop.f32.mrb[0].mxu0
        %917 = vdwg.mxu0
        %v918 = vsel %vm635, %v913, -inf
        %919 = vmax.xlane.f32.xlu0 %v918
        %v920 = vpop.xlane.xlu0 %919
        %v921 = vsub.f32 %v913, %v920
        %v922 = vmul.f32 %v921, 1.442695
        %v923 = vpow.pop %v922
        %v924 = vsel %vm635, %v923, 0.0
        %925 = vadd.xlane.f32.xlu0 %v924
        %v926 = vpop.xlane.xlu0 %925
        %v927 = vrcp.pop %v926
        %v928 = vmul.f32 %v923, %v927
        %v929 = vld [vmem:[#allocation3] sm:$0xff]
        %v930 = vadd.f32 %v929, %v928
        %931 = vst.msk [vmem:[#allocation3] sm:$0xff] %vm635, %v930
        %v932 = vpack.c.bf16 %v928, %v928
        %933 = vrot.lane.b32.xlu0 %v631, 112
        %v934 = vpop.permute.xlu0 %933
        %v936 = vsel %vm635, %v932, 0
        %v939 = vsel %vm698, %v934, 0
        %941 = vmatprep.subr.bf16.mxu0 0
        %942 = vmatpush1.bf16.msra.mxu0 %v939
        %943 = vmatprep.subr.bf16.mxu0 0
        %944 = vmatpush1.bf16.msra.mxu0 0
        %945 = vmatprep.subr.bf16.mxu0 0
        %946 = vmatpush1.bf16.msra.mxu0 0
        %947 = vmatprep.subr.bf16.mxu0 0
        %948 = vmatpush1.bf16.msra.mxu0 0
        %949 = vmatprep.subr.bf16.mxu0 0
        %950 = vmatpush1.bf16.msra.mxu0 0
        %951 = vmatprep.subr.bf16.mxu0 0
        %952 = vmatpush1.bf16.msra.mxu0 0
        %953 = vmatprep.subr.bf16.mxu0 0
        %954 = vmatpush1.bf16.msra.mxu0 0
        %955 = vmatprep.subr.bf16.mxu0 0
        %956 = vmatpush1.bf16.msra.mxu0 0
        %957 = vmatprep.subr.bf16.mxu0 0
        %958 = vmatpush1.bf16.msra.mxu0 0
        %959 = vmatprep.subr.bf16.mxu0 0
        %960 = vmatpush1.bf16.msra.mxu0 0
        %961 = vmatprep.subr.bf16.mxu0 0
        %962 = vmatpush1.bf16.msra.mxu0 0
        %963 = vmatprep.subr.bf16.mxu0 0
        %964 = vmatpush1.bf16.msra.mxu0 0
        %965 = vmatprep.subr.bf16.mxu0 0
        %966 = vmatpush1.bf16.msra.mxu0 0
        %967 = vmatprep.subr.bf16.mxu0 0
        %968 = vmatpush1.bf16.msra.mxu0 0
        %969 = vmatprep.subr.bf16.mxu0 0
        %970 = vmatpush1.bf16.msra.mxu0 0
        %971 = vmatprep.subr.bf16.mxu0 0
        %972 = vmatpush1.bf16.msra.mxu0 0
        %973 = vmatprep.mubr.bf16.mxu0 0
        %974 = vmatmul.mubr.bf16.gmra.mrb[0].mxu0 %v936
        %v975 = vpop.f32.mrb[0].mxu0
        %v976 = vadd.f32 0.0, %v975
        %v977 = vpop.f32.mrb[0].mxu0
        %v978 = vpop.f32.mrb[0].mxu0
        %v979 = vpop.f32.mrb[0].mxu0
        %980 = vdwg.mxu0
        %v981 = vpack.c.bf16 %v976, %v976
        %v983 = vunpack.c.l.b16 %v981
        %v984 = vpack.c.b16 %v983, %v983
        %985 = vrot.lane.b32.xlu0 %v984, 16
        %v986 = vpop.permute.xlu0 %985
        %vm988 = vcmask 191616
        %989 = vst.msk [vmem:[#allocation2] sm:$0xf] %vm988, %v986
        %990 = vrot.lane.b32.xlu0 %v630, 104
        %v991 = vpop.permute.xlu0 %990
        %992 = vrot.lane.b32.xlu0 %v630, 72
        %v993 = vpop.permute.xlu0 %992
        %v995 = vsel %vm635, %v991, 0
        %v998 = vsel %vm635, %v993, 0
        %1000 = vmatprep.subr.bf16.mxu0 0
        %1001 = vmatpush1.bf16.xpose.msra.mxu0 %v998
        %1002 = vmatprep.subr.bf16.mxu0 0
        %1003 = vmatpush1.bf16.xpose.msra.mxu0 0
        %1004 = vmatprep.subr.bf16.mxu0 0
        %1005 = vmatpush1.bf16.xpose.msra.mxu0 0
        %1006 = vmatprep.subr.bf16.mxu0 0
        %1007 = vmatpush1.bf16.xpose.msra.mxu0 0
        %1008 = vmatprep.subr.bf16.mxu0 0
        %1009 = vmatpush1.bf16.xpose.msra.mxu0 0
        %1010 = vmatprep.subr.bf16.mxu0 0
        %1011 = vmatpush1.bf16.xpose.msra.mxu0 0
        %1012 = vmatprep.subr.bf16.mxu0 0
        %1013 = vmatpush1.bf16.xpose.msra.mxu0 0
        %1014 = vmatprep.subr.bf16.mxu0 0
        %1015 = vmatpush1.bf16.xpose.msra.mxu0 0
        %1016 = vmatprep.subr.bf16.mxu0 0
        %1017 = vmatpush1.bf16.xpose.msra.mxu0 0
        %1018 = vmatprep.subr.bf16.mxu0 0
        %1019 = vmatpush1.bf16.xpose.msra.mxu0 0
        %1020 = vmatprep.subr.bf16.mxu0 0
        %1021 = vmatpush1.bf16.xpose.msra.mxu0 0
        %1022 = vmatprep.subr.bf16.mxu0 0
        %1023 = vmatpush1.bf16.xpose.msra.mxu0 0
        %1024 = vmatprep.subr.bf16.mxu0 0
        %1025 = vmatpush1.bf16.xpose.msra.mxu0 0
        %1026 = vmatprep.subr.bf16.mxu0 0
        %1027 = vmatpush1.bf16.xpose.msra.mxu0 0
        %1028 = vmatprep.subr.bf16.mxu0 0
        %1029 = vmatpush1.bf16.xpose.msra.mxu0 0
        %1030 = vmatprep.subr.bf16.mxu0 0
        %1031 = vmatpush1.bf16.xpose.msra.mxu0 0
        %1032 = vmatprep.mubr.bf16.mxu0 0
        %1033 = vmatmul.mubr.bf16.gmra.mrb[0].mxu0 %v995
        %v1034 = vpop.f32.mrb[0].mxu0
        %v1035 = vadd.f32 0.0, %v1034
        %v1036 = vpop.f32.mrb[0].mxu0
        %v1037 = vpop.f32.mrb[0].mxu0
        %v1038 = vpop.f32.mrb[0].mxu0
        %1039 = vdwg.mxu0
        %v1040 = vsel %vm635, %v1035, -inf
        %1041 = vmax.xlane.f32.xlu0 %v1040
        %v1042 = vpop.xlane.xlu0 %1041
        %v1043 = vsub.f32 %v1035, %v1042
        %v1044 = vmul.f32 %v1043, 1.442695
        %v1045 = vpow.pop %v1044
        %v1046 = vsel %vm635, %v1045, 0.0
        %1047 = vadd.xlane.f32.xlu0 %v1046
        %v1048 = vpop.xlane.xlu0 %1047
        %v1049 = vrcp.pop %v1048
        %v1050 = vmul.f32 %v1045, %v1049
        %v1051 = vld [vmem:[#allocation3] sm:$0xff]
        %v1052 = vadd.f32 %v1051, %v1050
        %1053 = vst.msk [vmem:[#allocation3] sm:$0xff] %vm635, %v1052
        %v1054 = vpack.c.bf16 %v1050, %v1050
        %1055 = vrot.lane.b32.xlu0 %v631, 104
        %v1056 = vpop.permute.xlu0 %1055
        %v1058 = vsel %vm635, %v1054, 0
        %v1061 = vsel %vm698, %v1056, 0
        %1063 = vmatprep.subr.bf16.mxu0 0
        %1064 = vmatpush1.bf16.msra.mxu0 %v1061
        %1065 = vmatprep.subr.bf16.mxu0 0
        %1066 = vmatpush1.bf16.msra.mxu0 0
        %1067 = vmatprep.subr.bf16.mxu0 0
        %1068 = vmatpush1.bf16.msra.mxu0 0
        %1069 = vmatprep.subr.bf16.mxu0 0
        %1070 = vmatpush1.bf16.msra.mxu0 0
        %1071 = vmatprep.subr.bf16.mxu0 0
        %1072 = vmatpush1.bf16.msra.mxu0 0
        %1073 = vmatprep.subr.bf16.mxu0 0
        %1074 = vmatpush1.bf16.msra.mxu0 0
        %1075 = vmatprep.subr.bf16.mxu0 0
        %1076 = vmatpush1.bf16.msra.mxu0 0
        %1077 = vmatprep.subr.bf16.mxu0 0
        %1078 = vmatpush1.bf16.msra.mxu0 0
        %1079 = vmatprep.subr.bf16.mxu0 0
        %1080 = vmatpush1.bf16.msra.mxu0 0
        %1081 = vmatprep.subr.bf16.mxu0 0
        %1082 = vmatpush1.bf16.msra.mxu0 0
        %1083 = vmatprep.subr.bf16.mxu0 0
        %1084 = vmatpush1.bf16.msra.mxu0 0
        %1085 = vmatprep.subr.bf16.mxu0 0
        %1086 = vmatpush1.bf16.msra.mxu0 0
        %1087 = vmatprep.subr.bf16.mxu0 0
        %1088 = vmatpush1.bf16.msra.mxu0 0
        %1089 = vmatprep.subr.bf16.mxu0 0
        %1090 = vmatpush1.bf16.msra.mxu0 0
        %1091 = vmatprep.subr.bf16.mxu0 0
        %1092 = vmatpush1.bf16.msra.mxu0 0
        %1093 = vmatprep.subr.bf16.mxu0 0
        %1094 = vmatpush1.bf16.msra.mxu0 0
        %1095 = vmatprep.mubr.bf16.mxu0 0
        %1096 = vmatmul.mubr.bf16.gmra.mrb[0].mxu0 %v1058
        %v1097 = vpop.f32.mrb[0].mxu0
        %v1098 = vadd.f32 0.0, %v1097
        %v1099 = vpop.f32.mrb[0].mxu0
        %v1100 = vpop.f32.mrb[0].mxu0
        %v1101 = vpop.f32.mrb[0].mxu0
        %1102 = vdwg.mxu0
        %v1103 = vpack.c.bf16 %v1098, %v1098
        %v1105 = vunpack.c.l.b16 %v1103
        %v1106 = vpack.c.b16 %v1105, %v1105
        %1107 = vrot.lane.b32.xlu0 %v1106, 24
        %v1108 = vpop.permute.xlu0 %1107
        %vm1110 = vcmask 257216
        %1111 = vst.msk [vmem:[#allocation2] sm:$0xf] %vm1110, %v1108
        %v1112 = vld [vmem:[#allocation2] sm:$0xf]
        %v1113 = vld [vmem:[#allocation9] sm:$0xf]
        %v1114 = vld [vmem:[#allocation9 + $0x4] sm:$0xf]
        %v1115 = vld [vmem:[#allocation9 + $0x8] sm:$0xf]
        %v1116 = vld [vmem:[#allocation9 + $0xc] sm:$0xf]
        %v1117 = vlaneseq
        %v1118 = vshrl.u32 %v1117, 7
        %v1119 = vsub.s32 3, %v1118
        %v1120 = vrot.slane %v470, %v1119
        %v1125 = vunpack.c.l.b16 %v1113
        %v1126 = vunpack.c.l.b16 %v1114
        %v1127 = vunpack.c.l.b16 %v1115
        %v1128 = vunpack.c.l.b16 %v1116
        %v1129 = vpack.c.b16 %v1126, %v1125
        %v1130 = vpack.c.b16 %v1128, %v1127
        %v1134 = vsel %vm471, %v1112, 0
        %1136 = vmatprep.subr.bf16.mxu0 0
        %1137 = vmatpush1.bf16.msra.mxu0 %v1129
        %1138 = vmatprep.subr.bf16.mxu0 0
        %1139 = vmatpush1.bf16.msra.mxu0 %v1130
        %1140 = vmatprep.subr.bf16.mxu0 0
        %1141 = vmatpush1.bf16.msra.mxu0 0
        %1142 = vmatprep.subr.bf16.mxu0 0
        %1143 = vmatpush1.bf16.msra.mxu0 0
        %1144 = vmatprep.subr.bf16.mxu0 0
        %1145 = vmatpush1.bf16.msra.mxu0 0
        %1146 = vmatprep.subr.bf16.mxu0 0
        %1147 = vmatpush1.bf16.msra.mxu0 0
        %1148 = vmatprep.subr.bf16.mxu0 0
        %1149 = vmatpush1.bf16.msra.mxu0 0
        %1150 = vmatprep.subr.bf16.mxu0 0
        %1151 = vmatpush1.bf16.msra.mxu0 0
        %1152 = vmatprep.subr.bf16.mxu0 0
        %1153 = vmatpush1.bf16.msra.mxu0 0
        %1154 = vmatprep.subr.bf16.mxu0 0
        %1155 = vmatpush1.bf16.msra.mxu0 0
        %1156 = vmatprep.subr.bf16.mxu0 0
        %1157 = vmatpush1.bf16.msra.mxu0 0
        %1158 = vmatprep.subr.bf16.mxu0 0
        %1159 = vmatpush1.bf16.msra.mxu0 0
        %1160 = vmatprep.subr.bf16.mxu0 0
        %1161 = vmatpush1.bf16.msra.mxu0 0
        %1162 = vmatprep.subr.bf16.mxu0 0
        %1163 = vmatpush1.bf16.msra.mxu0 0
        %1164 = vmatprep.subr.bf16.mxu0 0
        %1165 = vmatpush1.bf16.msra.mxu0 0
        %1166 = vmatprep.subr.bf16.mxu0 0
        %1167 = vmatpush1.bf16.msra.mxu0 0
        %1168 = vmatprep.mubr.bf16.mxu0 0
        %1169 = vmatmul.mubr.bf16.gmra.mrb[0].mxu0 %v1134
        %v1170 = vpop.f32.mrb[0].mxu0
        %v1171 = vadd.f32 %v1120, %v1170
        %v1172 = vpop.f32.mrb[0].mxu0
        %v1173 = vpop.f32.mrb[0].mxu0
        %v1174 = vpop.f32.mrb[0].mxu0
        %1175 = vdwg.mxu0
        %v1176 = vadd.f32 %v468, %v1171
        %v1177 = vsel %vm471, %v1176, 0.0
        %1178 = vadd.xlane.f32.xlu0 %v1177
        %v1179 = vpop.xlane.xlu0 %1178
        %v1180 = vmul.f32 %v1179, %v475
        %v1181 = vsub.f32 %v1176, %v1180
        %v1182 = vmul.f32 %v1181, %v1181
        %v1183 = vsel %vm471, %v1182, 0.0
        %1184 = vadd.xlane.f32.xlu0 %v1183
        %v1185 = vpop.xlane.xlu0 %1184
        %v1186 = vmul.f32 %v1185, %v475
        %v1187 = vadd.f32 %v1186, 1e-05
        %v1188 = vrsqrt.pop %v1187
        %v1189 = vmul.f32 %v1181, %v1188
        %v1190 = vlaneseq
        %v1191 = vshrl.u32 %v1190, 7
        %v1192 = vsub.s32 4, %v1191
        %v1193 = vrot.slane %v470, %v1192
        %v1194 = vmul.f32 %v1189, %v1193
        %v1195 = vlaneseq
        %v1196 = vshrl.u32 %v1195, 7
        %v1197 = vsub.s32 5, %v1196
        %v1198 = vrot.slane %v470, %v1197
        %v1199 = vadd.f32 %v1194, %v1198
        %v1200 = vpack.c.bf16 %v1199, %v1199
        %v1201 = vld [vmem:[%s8] sm:$0x1]
        %v1202 = vld [vmem:[#allocation10] sm:$0xf]
        %v1203 = vld [vmem:[#allocation10 + $0x4] sm:$0xf]
        %v1204 = vld [vmem:[#allocation10 + $0x8] sm:$0xf]
        %v1205 = vld [vmem:[#allocation10 + $0xc] sm:$0xf]
        %v1207 = vlaneseq
        %v1208 = vshrl.u32 %v1207, 7
        %v1209 = vsub.s32 0, %v1208
        %v1210 = vrot.slane %v1201, %v1209
        %v1216 = vunpack.c.l.b16 %v1202
        %v1217 = vunpack.c.l.b16 %v1203
        %v1218 = vunpack.c.l.b16 %v1204
        %v1219 = vunpack.c.l.b16 %v1205
        %v1220 = vpack.c.b16 %v1217, %v1216
        %v1221 = vpack.c.b16 %v1219, %v1218
        %v1225 = vsel %vm471, %v1200, 0
        %1227 = vmatprep.subr.bf16.mxu0 0
        %1228 = vmatpush1.bf16.msra.mxu0 %v1220
        %1229 = vmatprep.subr.bf16.mxu0 0
        %1230 = vmatpush1.bf16.msra.mxu0 %v1221
        %1231 = vmatprep.subr.bf16.mxu0 0
        %1232 = vmatpush1.bf16.msra.mxu0 0
        %1233 = vmatprep.subr.bf16.mxu0 0
        %1234 = vmatpush1.bf16.msra.mxu0 0
        %1235 = vmatprep.subr.bf16.mxu0 0
        %1236 = vmatpush1.bf16.msra.mxu0 0
        %1237 = vmatprep.subr.bf16.mxu0 0
        %1238 = vmatpush1.bf16.msra.mxu0 0
        %1239 = vmatprep.subr.bf16.mxu0 0
        %1240 = vmatpush1.bf16.msra.mxu0 0
        %1241 = vmatprep.subr.bf16.mxu0 0
        %1242 = vmatpush1.bf16.msra.mxu0 0
        %1243 = vmatprep.subr.bf16.mxu0 0
        %1244 = vmatpush1.bf16.msra.mxu0 0
        %1245 = vmatprep.subr.bf16.mxu0 0
        %1246 = vmatpush1.bf16.msra.mxu0 0
        %1247 = vmatprep.subr.bf16.mxu0 0
        %1248 = vmatpush1.bf16.msra.mxu0 0
        %1249 = vmatprep.subr.bf16.mxu0 0
        %1250 = vmatpush1.bf16.msra.mxu0 0
        %1251 = vmatprep.subr.bf16.mxu0 0
        %1252 = vmatpush1.bf16.msra.mxu0 0
        %1253 = vmatprep.subr.bf16.mxu0 0
        %1254 = vmatpush1.bf16.msra.mxu0 0
        %1255 = vmatprep.subr.bf16.mxu0 0
        %1256 = vmatpush1.bf16.msra.mxu0 0
        %1257 = vmatprep.subr.bf16.mxu0 0
        %1258 = vmatpush1.bf16.msra.mxu0 0
        %1259 = vmatprep.mubr.bf16.mxu0 0
        %1260 = vmatmul.mubr.bf16.gmra.mrb[0].mxu0 %v1225
        %v1261 = vpop.f32.mrb[0].mxu0
        %v1262 = vadd.f32 %v1210, %v1261
        %v1263 = vpop.f32.mrb[0].mxu0
        %v1264 = vpop.f32.mrb[0].mxu0
        %v1265 = vpop.f32.mrb[0].mxu0
        %1266 = vdwg.mxu0
        %v1267 = vmax.f32 %v1262, 0.0
        %v1268 = vpack.c.bf16 %v1267, %v1267
        %v1269 = vld [vmem:[%s9] sm:$0xf]
        %v1270 = vld [vmem:[%s9 + $0x4] sm:$0xf]
        %v1271 = vld [vmem:[%s9 + $0x8] sm:$0xf]
        %v1272 = vld [vmem:[%s9 + $0xc] sm:$0xf]
        %v1273 = vld [vmem:[%s9 + $0x10] sm:$0xf]
        %v1274 = vld [vmem:[%s9 + $0x14] sm:$0xf]
        %v1275 = vld [vmem:[%s9 + $0x18] sm:$0xf]
        %v1276 = vld [vmem:[%s9 + $0x1c] sm:$0xf]
        %v1285 = vunpack.c.l.b16 %v1269
        %v1286 = vunpack.c.l.b16 %v1270
        %v1287 = vunpack.c.l.b16 %v1271
        %v1288 = vunpack.c.l.b16 %v1272
        %v1289 = vunpack.c.l.b16 %v1273
        %v1290 = vunpack.c.l.b16 %v1274
        %v1291 = vunpack.c.l.b16 %v1275
        %v1292 = vunpack.c.l.b16 %v1276
        %v1293 = vpack.c.b16 %v1286, %v1285
        %v1294 = vpack.c.b16 %v1288, %v1287
        %v1295 = vpack.c.b16 %v1290, %v1289
        %v1296 = vpack.c.b16 %v1292, %v1291
        %vm1301 = vcmask 523264
        %v1303 = vsel %vm1301, %v1268, 0
        %1305 = vmatprep.subr.bf16.mxu0 0
        %1306 = vmatpush1.bf16.msra.mxu0 %v1293
        %1307 = vmatprep.subr.bf16.mxu0 0
        %1308 = vmatpush1.bf16.msra.mxu0 %v1294
        %1309 = vmatprep.subr.bf16.mxu0 0
        %1310 = vmatpush1.bf16.msra.mxu0 %v1295
        %1311 = vmatprep.subr.bf16.mxu0 0
        %1312 = vmatpush1.bf16.msra.mxu0 %v1296
        %1313 = vmatprep.subr.bf16.mxu0 0
        %1314 = vmatpush1.bf16.msra.mxu0 0
        %1315 = vmatprep.subr.bf16.mxu0 0
        %1316 = vmatpush1.bf16.msra.mxu0 0
        %1317 = vmatprep.subr.bf16.mxu0 0
        %1318 = vmatpush1.bf16.msra.mxu0 0
        %1319 = vmatprep.subr.bf16.mxu0 0
        %1320 = vmatpush1.bf16.msra.mxu0 0
        %1321 = vmatprep.subr.bf16.mxu0 0
        %1322 = vmatpush1.bf16.msra.mxu0 0
        %1323 = vmatprep.subr.bf16.mxu0 0
        %1324 = vmatpush1.bf16.msra.mxu0 0
        %1325 = vmatprep.subr.bf16.mxu0 0
        %1326 = vmatpush1.bf16.msra.mxu0 0
        %1327 = vmatprep.subr.bf16.mxu0 0
        %1328 = vmatpush1.bf16.msra.mxu0 0
        %1329 = vmatprep.subr.bf16.mxu0 0
        %1330 = vmatpush1.bf16.msra.mxu0 0
        %1331 = vmatprep.subr.bf16.mxu0 0
        %1332 = vmatpush1.bf16.msra.mxu0 0
        %1333 = vmatprep.subr.bf16.mxu0 0
        %1334 = vmatpush1.bf16.msra.mxu0 0
        %1335 = vmatprep.subr.bf16.mxu0 0
        %1336 = vmatpush1.bf16.msra.mxu0 0
        %1337 = vmatprep.mubr.bf16.mxu0 0
        %1338 = vmatmul.mubr.bf16.gmra.mrb[0].mxu0 %v1303
        %v1339 = vpop.f32.mrb[0].mxu0
        %v1340 = vadd.f32 0.0, %v1339
        %v1341 = vpop.f32.mrb[0].mxu0
        %v1342 = vpop.f32.mrb[0].mxu0
        %v1343 = vpop.f32.mrb[0].mxu0
        %1344 = vdwg.mxu0
        %v1345 = vadd.f32 %v1176, %v1340
        %v1346 = vlaneseq
        %v1347 = vshrl.u32 %v1346, 7
        %v1348 = vsub.s32 6, %v1347
        %v1349 = vrot.slane %v470, %v1348
        %v1350 = vadd.f32 %v1345, %v1349
        %1351 = vst.msk [vmem:[%s451] sm:$0xff] %vm471, %v1350
        %v1352 = vld [vmem:[#allocation3] sm:$0xff]
        %v1353 = vmul.f32 %v1352, 0.25
        %v1354 = vpack.c.bf16 %v1353, %v1353
        %1355 = vst.msk [vmem:[%s458] sm:$0xf] %vm743, %v1354
        %s1356 = sand.u32 %s260, 1
        %s1357 = scalar_lea.sflag [#allocation6], %s1356
        %s1358 = sand.u32 %s260, 1
        %s1359 = smul.addr %s1358, 8
        %s1360 = scalar_lea.vmem [#allocation12], %s1359
        %s1361 = sand.u32 %s286, 1
        %s1362 = scalar_lea.sflag [#allocation14], %s1361
        %s1363 = sand.u32 %s286, 1
        %s1364 = smul.addr %s1363, 4
        %s1365 = scalar_lea.vmem [#allocation13], %s1364
        // Predicated region
        $region77: #{tpu_custom_call.1} parent=59 // pred_check
          %p1366 = pneg %p270
        $region78: #{tpu_custom_call.1} parent=59 // pred_check_branch
          %1368 = sbr.rel (%p1366) target = $region80
        $region79: #{tpu_custom_call.1} parent=59 // pred_region
          %s1370 = ssub.s32 128, 128
          %1371 = vsyncadd %s1357, %s1370
          %s1372 = smul.addr %s32, 128
          %s1373 = scalar_lea.hbm %s10, %s1372
          %s1375 = sshll.u32 %s1360, 4
          %s1376 = int_to_ptr.vmem [resolvable:$true] %s1375
          %1378 = dma.vmem_to_hbm [thread:$0]  %s1376, 128, %s1373, %s1357
        $region80: #{tpu_custom_call.1} parent=59 // pred_fallthru
          _
        // Predicated region
        $region81: #{tpu_custom_call.1} parent=59 // pred_check
          %p1379 = pneg %p296
        $region82: #{tpu_custom_call.1} parent=59 // pred_check_branch
          %1381 = sbr.rel (%p1379) target = $region84
        $region83: #{tpu_custom_call.1} parent=59 // pred_region
          %s1383 = ssub.s32 64, 64
          %1384 = vsyncadd %s1362, %s1383
          %s1385 = smul.addr %s32, 64
          %s1386 = scalar_lea.hbm %s11, %s1385
          %s1388 = sshll.u32 %s1365, 4
          %s1389 = int_to_ptr.vmem [resolvable:$true] %s1388
          %1391 = dma.vmem_to_hbm [thread:$0]  %s1389, 64, %s1386, %s1362
        $region84: #{tpu_custom_call.1} parent=59 // pred_fallthru
          _
      $region60: #{tpu_custom_call.1} parent=5 // pred_fallthru
        _
      %p1392 = scmp.le.s32.totalorder 2, %s27
      // Predicated region
      $region85: #{tpu_custom_call.1} parent=5 // pred_check
        %p1393 = pneg %p1392
      $region86: #{tpu_custom_call.1} parent=5 // pred_check_branch
        %1395 = sbr.rel (%p1393) target = $region88
      $region87: #{tpu_custom_call.1} parent=5 // pred_region
        %s1396 = ssub.s32 %s27, 2
        // Predicated region
        $region89: #{tpu_custom_call.1} parent=87 // pred_check
          %p1397 = pneg %p276
        $region90: #{tpu_custom_call.1} parent=87 // pred_check_branch
          %1399 = sbr.rel (%p1397) target = $region92
        $region91: #{tpu_custom_call.1} parent=87 // pred_region
          %s1400 = sand.u32 %s261, 1
          %s1401 = scalar_lea.sflag [#allocation6], %s1400
          %s1402 = sand.u32 %s261, 1
          %s1403 = smul.addr %s1402, 8
          %s1404 = scalar_lea.vmem [#allocation12], %s1403
          %1405 = dma.done %s1401, 128
        $region92: #{tpu_custom_call.1} parent=87 // pred_fallthru
          _
        // Predicated region
        $region93: #{tpu_custom_call.1} parent=87 // pred_check
          %p1406 = pneg %p302
        $region94: #{tpu_custom_call.1} parent=87 // pred_check_branch
          %1408 = sbr.rel (%p1406) target = $region96
        $region95: #{tpu_custom_call.1} parent=87 // pred_region
          %s1409 = sand.u32 %s287, 1
          %s1410 = scalar_lea.sflag [#allocation14], %s1409
          %s1411 = sand.u32 %s287, 1
          %s1412 = smul.addr %s1411, 4
          %s1413 = scalar_lea.vmem [#allocation13], %s1412
          %1414 = dma.done %s1410, 64
        $region96: #{tpu_custom_call.1} parent=87 // pred_fallthru
          _
      $region88: #{tpu_custom_call.1} parent=5 // pred_fallthru
        _
    $region6: #{tpu_custom_call.1} parent=1 // loop_footer
      %s31 = sadd.s32 1, %s27
    $region7: #{tpu_custom_call.1} parent=1 // loop_footer_branch
      %26 = sbr.rel target = $region3
    $region8: #{tpu_custom_call.1} parent=1 // loop_exit
      _
    %1415 = vsyncpa [#allocation5], 1
    %s1416 = scalar_lea.sflag [#allocation5], 1
    %1417 = vsyncpa %s1416, 1
    %1418 = vsyncpa [#allocation8], 1
    %1419 = vsyncpa [#allocation11], 1
    %1420 = vsyncpa [#allocation6], 1
    %s1421 = scalar_lea.sflag [#allocation6], 1
    %1422 = vsyncpa %s1421, 1
    %1423 = vsyncpa [#allocation14], 1
    %s1424 = scalar_lea.sflag [#allocation14], 1
    %1425 = vsyncpa %s1424, 1

</llo_original>
